<compile_context>
chip_gen: v5e
topology: v5e:2x2
jax: 0.10.0
libtpu: 0.0.40
codegen_flags: <defaults>
</compile_context>

<pallas_src>
import functools

import jax
import jax.numpy as jnp
from jax.experimental import pallas as pl
from jax.experimental.pallas import tpu as pltpu


# ----------------------------------------------------------------------------
# Fused Pallas kernel: the entire LinearRes block in one call.
# ----------------------------------------------------------------------------
def _linear_res_kernel(*refs, eps, has_transform):
    if has_transform:
        (x_ref,
         w1_ref, b1_ref, g1_ref, be1_ref,
         w2_ref, b2_ref, g2_ref, be2_ref,
         w3_ref, b3_ref, g3_ref, be3_ref,
         wt_ref, gt_ref, bet_ref,
         o_ref) = refs
    else:
        (x_ref,
         w1_ref, b1_ref, g1_ref, be1_ref,
         w2_ref, b2_ref, g2_ref, be2_ref,
         w3_ref, b3_ref, g3_ref, be3_ref,
         o_ref) = refs

    x = x_ref[...]                        # (M, n_in) f32
    xb = x.astype(jnp.bfloat16)           # bf16 operand for the MXU

    def bn_fold(y, gamma, beta):
        # Training-mode BatchNorm1d folded into a single scale/shift FMA pass.
        mean = jnp.mean(y, axis=0, keepdims=True)
        var = jnp.mean(jnp.square(y - mean), axis=0, keepdims=True)  # biased (PyTorch)
        s = gamma * jax.lax.rsqrt(var + eps)                         # EUP rsqrt
        t = beta - mean * s
        return y * s + t

    def linear_bn(inp_bf16, w_ref, bias, gamma, beta):
        y = jnp.dot(inp_bf16, w_ref[...], preferred_element_type=jnp.float32)
        if bias is not None:
            y = y + bias
        return bn_fold(y, gamma, beta)

    h1 = jnp.maximum(
        linear_bn(xb, w1_ref, b1_ref[...], g1_ref[...], be1_ref[...]), 0.0)
    h2 = jnp.maximum(
        linear_bn(h1.astype(jnp.bfloat16), w2_ref, b2_ref[...], g2_ref[...], be2_ref[...]),
        0.0)
    h3 = linear_bn(h2.astype(jnp.bfloat16), w3_ref, b3_ref[...], g3_ref[...], be3_ref[...])

    if has_transform:
        res = linear_bn(xb, wt_ref, None, gt_ref[...], bet_ref[...])
    else:
        res = x

    o_ref[...] = jnp.maximum(h3 + res, 0.0)


def linear_res_forward(params, x):
    """x: (M, n_in) f32.  Returns (M, n_out) f32.  Entire block = one pallas_call."""
    m, _ = x.shape
    n_out = params["w1"].shape[1]
    has_transform = "wt" in params

    # Keep M a multiple of 8 (sublanes) and n_out a multiple of 128 (lanes) for
    # dense, unmasked vector stores.
    args = [x.astype(jnp.float32),
            params["w1"], params["b1"], params["g1"], params["be1"],
            params["w2"], params["b2"], params["g2"], params["be2"],
            params["w3"], params["b3"], params["g3"], params["be3"]]
    if has_transform:
        args += [params["wt"], params["gt"], params["bet"]]

    kernel = functools.partial(_linear_res_kernel, eps=1e-5,
                               has_transform=has_transform)

    return pl.pallas_call(
        kernel,
        out_shape=jax.ShapeDtypeStruct((m, n_out), jnp.float32),
        in_specs=[pl.BlockSpec(memory_space=pltpu.MemorySpace.VMEM) for _ in args],
        out_specs=pl.BlockSpec(memory_space=pltpu.MemorySpace.VMEM),
    )(*args)


# ----------------------------------------------------------------------------
# Deterministic parameter initialization (PyTorch Linear / BatchNorm1d defaults)
# ----------------------------------------------------------------------------
def init_linear_res(key, n_in, n_out):
    k1, k2, k3, kt = jax.random.split(key, 4)

    def lin(k, fan_in, fan_out):
        kw, kb = jax.random.split(k)
        bound = fan_in ** -0.5
        w = jax.random.uniform(kw, (fan_in, fan_out), jnp.float32, -bound, bound)
        b = jax.random.uniform(kb, (1, fan_out), jnp.float32, -bound, bound)
        return w.astype(jnp.bfloat16), b          # bf16 weights for the MXU

    p = {}
    p["w1"], p["b1"] = lin(k1, n_in, n_out)
    p["w2"], p["b2"] = lin(k2, n_out, n_out)
    p["w3"], p["b3"] = lin(k3, n_out, n_out)
    for i in ("1", "2", "3"):
        p["g" + i] = jnp.ones((1, n_out), jnp.float32)
        p["be" + i] = jnp.zeros((1, n_out), jnp.float32)
    if n_in != n_out:
        bound = n_in ** -0.5
        wt = jax.random.uniform(kt, (n_in, n_out), jnp.float32, -bound, bound)
        p["wt"] = wt.astype(jnp.bfloat16)
        p["gt"] = jnp.ones((1, n_out), jnp.float32)
        p["bet"] = jnp.zeros((1, n_out), jnp.float32)
    return p


# ----------------------------------------------------------------------------
# Pure-JAX reference (same bf16 matmul precision, un-folded BatchNorm)
# ----------------------------------------------------------------------------
def _bn_train_ref(y, gamma, beta, eps=1e-5):
    mean = jnp.mean(y, axis=0, keepdims=True)
    var = jnp.mean(jnp.square(y - mean), axis=0, keepdims=True)
    return (y - mean) * jax.lax.rsqrt(var + eps) * gamma + beta


def linear_res_reference(params, x):
    xb = x.astype(jnp.bfloat16)
    y = jnp.dot(xb, params["w1"], preferred_element_type=jnp.float32) + params["b1"]
    h = jnp.maximum(_bn_train_ref(y, params["g1"], params["be1"]), 0.0)
    y = jnp.dot(h.astype(jnp.bfloat16), params["w2"],
                preferred_element_type=jnp.float32) + params["b2"]
    h = jnp.maximum(_bn_train_ref(y, params["g2"], params["be2"]), 0.0)
    y = jnp.dot(h.astype(jnp.bfloat16), params["w3"],
                preferred_element_type=jnp.float32) + params["b3"]
    h = _bn_train_ref(y, params["g3"], params["be3"])
    if "wt" in params:
        res = _bn_train_ref(
            jnp.dot(xb, params["wt"], preferred_element_type=jnp.float32),
            params["gt"], params["bet"])
    else:
        res = x
    return jnp.maximum(h + res, 0.0)


if __name__ == "__main__":
    key = jax.random.PRNGKey(0)
    kp1, kp2, kx1, kx2 = jax.random.split(key, 4)

    # Config 1: n_in != n_out -> residual path goes through the Linear+BN transform.
    n_in, n_out, batch = 64, 128, 256
    params = init_linear_res(kp1, n_in, n_out)
    x = jax.random.normal(kx1, (batch, n_in), jnp.float32)
    out = jax.block_until_ready(linear_res_forward(params, x))
    ref = linear_res_reference(params, x)
    assert out.shape == (batch, n_out), out.shape
    assert jnp.all(jnp.isfinite(out))
    assert jnp.allclose(out, ref, rtol=5e-2, atol=5e-2), \
        float(jnp.max(jnp.abs(out - ref)))

    # Config 2: n_in == n_out -> identity residual.
    n2, batch2 = 128, 64
    params2 = init_linear_res(kp2, n2, n2)
    x2 = jax.random.normal(kx2, (batch2, n2), jnp.float32)
    out2 = jax.block_until_ready(linear_res_forward(params2, x2))
    ref2 = linear_res_reference(params2, x2)
    assert out2.shape == (batch2, n2), out2.shape
    assert jnp.all(jnp.isfinite(out2))
    assert jnp.allclose(out2, ref2, rtol=5e-2, atol=5e-2), \
        float(jnp.max(jnp.abs(out2 - ref2)))

    print("KERNEL_OK")
</pallas_src>

<mosaic_0001>
module attributes {stable_mosaic.version = 11 : i64} {
  func.func @_linear_res_kernel(%arg0: memref<256x64xf32, #tpu.memory_space<vmem>>, %arg1: memref<64x128xbf16, #tpu.memory_space<vmem>>, %arg2: memref<1x128xf32, #tpu.memory_space<vmem>>, %arg3: memref<1x128xf32, #tpu.memory_space<vmem>>, %arg4: memref<1x128xf32, #tpu.memory_space<vmem>>, %arg5: memref<128x128xbf16, #tpu.memory_space<vmem>>, %arg6: memref<1x128xf32, #tpu.memory_space<vmem>>, %arg7: memref<1x128xf32, #tpu.memory_space<vmem>>, %arg8: memref<1x128xf32, #tpu.memory_space<vmem>>, %arg9: memref<128x128xbf16, #tpu.memory_space<vmem>>, %arg10: memref<1x128xf32, #tpu.memory_space<vmem>>, %arg11: memref<1x128xf32, #tpu.memory_space<vmem>>, %arg12: memref<1x128xf32, #tpu.memory_space<vmem>>, %arg13: memref<64x128xbf16, #tpu.memory_space<vmem>>, %arg14: memref<1x128xf32, #tpu.memory_space<vmem>>, %arg15: memref<1x128xf32, #tpu.memory_space<vmem>>, %arg16: memref<256x128xf32, #tpu.memory_space<vmem>>) attributes {dimension_semantics = [], scalar_prefetch = 0 : i64, scratch_operands = 0 : i64, tpu.core_type = #tpu.core_type<tc>} {
    %c0 = arith.constant 0 : index
    %c0_0 = arith.constant 0 : index
    %0 = vector.load %arg0[%c0, %c0_0] : memref<256x64xf32, #tpu.memory_space<vmem>>, vector<256x64xf32>
    %1 = arith.truncf %0 : vector<256x64xf32> to vector<256x64xbf16>
    %c0_1 = arith.constant 0 : index
    %c0_2 = arith.constant 0 : index
    %2 = vector.load %arg2[%c0_1, %c0_2] : memref<1x128xf32, #tpu.memory_space<vmem>>, vector<1x128xf32>
    %c0_3 = arith.constant 0 : index
    %c0_4 = arith.constant 0 : index
    %3 = vector.load %arg3[%c0_3, %c0_4] : memref<1x128xf32, #tpu.memory_space<vmem>>, vector<1x128xf32>
    %c0_5 = arith.constant 0 : index
    %c0_6 = arith.constant 0 : index
    %4 = vector.load %arg4[%c0_5, %c0_6] : memref<1x128xf32, #tpu.memory_space<vmem>>, vector<1x128xf32>
    %c0_7 = arith.constant 0 : index
    %c0_8 = arith.constant 0 : index
    %5 = vector.load %arg1[%c0_7, %c0_8] : memref<64x128xbf16, #tpu.memory_space<vmem>>, vector<64x128xbf16>
    %cst = arith.constant dense<0.000000e+00> : vector<256x128xf32>
    %6 = tpu.matmul %1, %5, %cst {dimension_numbers = #tpu.dot_dimension_numbers<[1], [0], [0], [1], [0, 0, 1, 1], [], []>} : vector<256x64xbf16>, vector<64x128xbf16>, vector<256x128xf32> -> vector<256x128xf32>
    %7 = vector.broadcast %2 : vector<1x128xf32> to vector<256x128xf32>
    %8 = arith.addf %6, %7 : vector<256x128xf32>
    %cst_9 = arith.constant dense<0.000000e+00> : vector<128xf32>
    %9 = vector.multi_reduction <add>, %8, %cst_9 [0] : vector<256x128xf32> to vector<128xf32>
    %10 = vector.shape_cast %9 : vector<128xf32> to vector<1x128xf32>
    %cst_10 = arith.constant 2.560000e+02 : f32
    %11 = vector.broadcast %cst_10 : f32 to vector<1x128xf32>
    %12 = arith.divf %10, %11 : vector<1x128xf32>
    %13 = vector.broadcast %12 : vector<1x128xf32> to vector<256x128xf32>
    %14 = arith.subf %8, %13 : vector<256x128xf32>
    %15 = arith.mulf %14, %14 : vector<256x128xf32>
    %cst_11 = arith.constant dense<0.000000e+00> : vector<128xf32>
    %16 = vector.multi_reduction <add>, %15, %cst_11 [0] : vector<256x128xf32> to vector<128xf32>
    %17 = vector.shape_cast %16 : vector<128xf32> to vector<1x128xf32>
    %cst_12 = arith.constant 2.560000e+02 : f32
    %18 = vector.broadcast %cst_12 : f32 to vector<1x128xf32>
    %19 = arith.divf %17, %18 : vector<1x128xf32>
    %cst_13 = arith.constant 9.99999974E-6 : f32
    %20 = vector.broadcast %cst_13 : f32 to vector<1x128xf32>
    %21 = arith.addf %19, %20 : vector<1x128xf32>
    %22 = math.rsqrt %21 : vector<1x128xf32>
    %23 = arith.mulf %3, %22 : vector<1x128xf32>
    %24 = arith.mulf %12, %23 : vector<1x128xf32>
    %25 = arith.subf %4, %24 : vector<1x128xf32>
    %26 = vector.broadcast %23 : vector<1x128xf32> to vector<256x128xf32>
    %27 = arith.mulf %8, %26 : vector<256x128xf32>
    %28 = vector.broadcast %25 : vector<1x128xf32> to vector<256x128xf32>
    %29 = arith.addf %27, %28 : vector<256x128xf32>
    %cst_14 = arith.constant 0.000000e+00 : f32
    %30 = vector.broadcast %cst_14 : f32 to vector<256x128xf32>
    %31 = arith.maximumf %29, %30 : vector<256x128xf32>
    %32 = arith.truncf %31 : vector<256x128xf32> to vector<256x128xbf16>
    %c0_15 = arith.constant 0 : index
    %c0_16 = arith.constant 0 : index
    %33 = vector.load %arg6[%c0_15, %c0_16] : memref<1x128xf32, #tpu.memory_space<vmem>>, vector<1x128xf32>
    %c0_17 = arith.constant 0 : index
    %c0_18 = arith.constant 0 : index
    %34 = vector.load %arg7[%c0_17, %c0_18] : memref<1x128xf32, #tpu.memory_space<vmem>>, vector<1x128xf32>
    %c0_19 = arith.constant 0 : index
    %c0_20 = arith.constant 0 : index
    %35 = vector.load %arg8[%c0_19, %c0_20] : memref<1x128xf32, #tpu.memory_space<vmem>>, vector<1x128xf32>
    %c0_21 = arith.constant 0 : index
    %c0_22 = arith.constant 0 : index
    %36 = vector.load %arg5[%c0_21, %c0_22] : memref<128x128xbf16, #tpu.memory_space<vmem>>, vector<128x128xbf16>
    %cst_23 = arith.constant dense<0.000000e+00> : vector<256x128xf32>
    %37 = tpu.matmul %32, %36, %cst_23 {dimension_numbers = #tpu.dot_dimension_numbers<[1], [0], [0], [1], [0, 0, 1, 1], [], []>} : vector<256x128xbf16>, vector<128x128xbf16>, vector<256x128xf32> -> vector<256x128xf32>
    %38 = vector.broadcast %33 : vector<1x128xf32> to vector<256x128xf32>
    %39 = arith.addf %37, %38 : vector<256x128xf32>
    %cst_24 = arith.constant dense<0.000000e+00> : vector<128xf32>
    %40 = vector.multi_reduction <add>, %39, %cst_24 [0] : vector<256x128xf32> to vector<128xf32>
    %41 = vector.shape_cast %40 : vector<128xf32> to vector<1x128xf32>
    %cst_25 = arith.constant 2.560000e+02 : f32
    %42 = vector.broadcast %cst_25 : f32 to vector<1x128xf32>
    %43 = arith.divf %41, %42 : vector<1x128xf32>
    %44 = vector.broadcast %43 : vector<1x128xf32> to vector<256x128xf32>
    %45 = arith.subf %39, %44 : vector<256x128xf32>
    %46 = arith.mulf %45, %45 : vector<256x128xf32>
    %cst_26 = arith.constant dense<0.000000e+00> : vector<128xf32>
    %47 = vector.multi_reduction <add>, %46, %cst_26 [0] : vector<256x128xf32> to vector<128xf32>
    %48 = vector.shape_cast %47 : vector<128xf32> to vector<1x128xf32>
    %cst_27 = arith.constant 2.560000e+02 : f32
    %49 = vector.broadcast %cst_27 : f32 to vector<1x128xf32>
    %50 = arith.divf %48, %49 : vector<1x128xf32>
    %cst_28 = arith.constant 9.99999974E-6 : f32
    %51 = vector.broadcast %cst_28 : f32 to vector<1x128xf32>
    %52 = arith.addf %50, %51 : vector<1x128xf32>
    %53 = math.rsqrt %52 : vector<1x128xf32>
    %54 = arith.mulf %34, %53 : vector<1x128xf32>
    %55 = arith.mulf %43, %54 : vector<1x128xf32>
    %56 = arith.subf %35, %55 : vector<1x128xf32>
    %57 = vector.broadcast %54 : vector<1x128xf32> to vector<256x128xf32>
    %58 = arith.mulf %39, %57 : vector<256x128xf32>
    %59 = vector.broadcast %56 : vector<1x128xf32> to vector<256x128xf32>
    %60 = arith.addf %58, %59 : vector<256x128xf32>
    %cst_29 = arith.constant 0.000000e+00 : f32
    %61 = vector.broadcast %cst_29 : f32 to vector<256x128xf32>
    %62 = arith.maximumf %60, %61 : vector<256x128xf32>
    %63 = arith.truncf %62 : vector<256x128xf32> to vector<256x128xbf16>
    %c0_30 = arith.constant 0 : index
    %c0_31 = arith.constant 0 : index
    %64 = vector.load %arg10[%c0_30, %c0_31] : memref<1x128xf32, #tpu.memory_space<vmem>>, vector<1x128xf32>
    %c0_32 = arith.constant 0 : index
    %c0_33 = arith.constant 0 : index
    %65 = vector.load %arg11[%c0_32, %c0_33] : memref<1x128xf32, #tpu.memory_space<vmem>>, vector<1x128xf32>
    %c0_34 = arith.constant 0 : index
    %c0_35 = arith.constant 0 : index
    %66 = vector.load %arg12[%c0_34, %c0_35] : memref<1x128xf32, #tpu.memory_space<vmem>>, vector<1x128xf32>
    %c0_36 = arith.constant 0 : index
    %c0_37 = arith.constant 0 : index
    %67 = vector.load %arg9[%c0_36, %c0_37] : memref<128x128xbf16, #tpu.memory_space<vmem>>, vector<128x128xbf16>
    %cst_38 = arith.constant dense<0.000000e+00> : vector<256x128xf32>
    %68 = tpu.matmul %63, %67, %cst_38 {dimension_numbers = #tpu.dot_dimension_numbers<[1], [0], [0], [1], [0, 0, 1, 1], [], []>} : vector<256x128xbf16>, vector<128x128xbf16>, vector<256x128xf32> -> vector<256x128xf32>
    %69 = vector.broadcast %64 : vector<1x128xf32> to vector<256x128xf32>
    %70 = arith.addf %68, %69 : vector<256x128xf32>
    %cst_39 = arith.constant dense<0.000000e+00> : vector<128xf32>
    %71 = vector.multi_reduction <add>, %70, %cst_39 [0] : vector<256x128xf32> to vector<128xf32>
    %72 = vector.shape_cast %71 : vector<128xf32> to vector<1x128xf32>
    %cst_40 = arith.constant 2.560000e+02 : f32
    %73 = vector.broadcast %cst_40 : f32 to vector<1x128xf32>
    %74 = arith.divf %72, %73 : vector<1x128xf32>
    %75 = vector.broadcast %74 : vector<1x128xf32> to vector<256x128xf32>
    %76 = arith.subf %70, %75 : vector<256x128xf32>
    %77 = arith.mulf %76, %76 : vector<256x128xf32>
    %cst_41 = arith.constant dense<0.000000e+00> : vector<128xf32>
    %78 = vector.multi_reduction <add>, %77, %cst_41 [0] : vector<256x128xf32> to vector<128xf32>
    %79 = vector.shape_cast %78 : vector<128xf32> to vector<1x128xf32>
    %cst_42 = arith.constant 2.560000e+02 : f32
    %80 = vector.broadcast %cst_42 : f32 to vector<1x128xf32>
    %81 = arith.divf %79, %80 : vector<1x128xf32>
    %cst_43 = arith.constant 9.99999974E-6 : f32
    %82 = vector.broadcast %cst_43 : f32 to vector<1x128xf32>
    %83 = arith.addf %81, %82 : vector<1x128xf32>
    %84 = math.rsqrt %83 : vector<1x128xf32>
    %85 = arith.mulf %65, %84 : vector<1x128xf32>
    %86 = arith.mulf %74, %85 : vector<1x128xf32>
    %87 = arith.subf %66, %86 : vector<1x128xf32>
    %88 = vector.broadcast %85 : vector<1x128xf32> to vector<256x128xf32>
    %89 = arith.mulf %70, %88 : vector<256x128xf32>
    %90 = vector.broadcast %87 : vector<1x128xf32> to vector<256x128xf32>
    %91 = arith.addf %89, %90 : vector<256x128xf32>
    %c0_44 = arith.constant 0 : index
    %c0_45 = arith.constant 0 : index
    %92 = vector.load %arg14[%c0_44, %c0_45] : memref<1x128xf32, #tpu.memory_space<vmem>>, vector<1x128xf32>
    %c0_46 = arith.constant 0 : index
    %c0_47 = arith.constant 0 : index
    %93 = vector.load %arg15[%c0_46, %c0_47] : memref<1x128xf32, #tpu.memory_space<vmem>>, vector<1x128xf32>
    %c0_48 = arith.constant 0 : index
    %c0_49 = arith.constant 0 : index
    %94 = vector.load %arg13[%c0_48, %c0_49] : memref<64x128xbf16, #tpu.memory_space<vmem>>, vector<64x128xbf16>
    %cst_50 = arith.constant dense<0.000000e+00> : vector<256x128xf32>
    %95 = tpu.matmul %1, %94, %cst_50 {dimension_numbers = #tpu.dot_dimension_numbers<[1], [0], [0], [1], [0, 0, 1, 1], [], []>} : vector<256x64xbf16>, vector<64x128xbf16>, vector<256x128xf32> -> vector<256x128xf32>
    %cst_51 = arith.constant dense<0.000000e+00> : vector<128xf32>
    %96 = vector.multi_reduction <add>, %95, %cst_51 [0] : vector<256x128xf32> to vector<128xf32>
    %97 = vector.shape_cast %96 : vector<128xf32> to vector<1x128xf32>
    %cst_52 = arith.constant 2.560000e+02 : f32
    %98 = vector.broadcast %cst_52 : f32 to vector<1x128xf32>
    %99 = arith.divf %97, %98 : vector<1x128xf32>
    %100 = vector.broadcast %99 : vector<1x128xf32> to vector<256x128xf32>
    %101 = arith.subf %95, %100 : vector<256x128xf32>
    %102 = arith.mulf %101, %101 : vector<256x128xf32>
    %cst_53 = arith.constant dense<0.000000e+00> : vector<128xf32>
    %103 = vector.multi_reduction <add>, %102, %cst_53 [0] : vector<256x128xf32> to vector<128xf32>
    %104 = vector.shape_cast %103 : vector<128xf32> to vector<1x128xf32>
    %cst_54 = arith.constant 2.560000e+02 : f32
    %105 = vector.broadcast %cst_54 : f32 to vector<1x128xf32>
    %106 = arith.divf %104, %105 : vector<1x128xf32>
    %cst_55 = arith.constant 9.99999974E-6 : f32
    %107 = vector.broadcast %cst_55 : f32 to vector<1x128xf32>
    %108 = arith.addf %106, %107 : vector<1x128xf32>
    %109 = math.rsqrt %108 : vector<1x128xf32>
    %110 = arith.mulf %92, %109 : vector<1x128xf32>
    %111 = arith.mulf %99, %110 : vector<1x128xf32>
    %112 = arith.subf %93, %111 : vector<1x128xf32>
    %113 = vector.broadcast %110 : vector<1x128xf32> to vector<256x128xf32>
    %114 = arith.mulf %95, %113 : vector<256x128xf32>
    %115 = vector.broadcast %112 : vector<1x128xf32> to vector<256x128xf32>
    %116 = arith.addf %114, %115 : vector<256x128xf32>
    %117 = arith.addf %91, %116 : vector<256x128xf32>
    %cst_56 = arith.constant 0.000000e+00 : f32
    %118 = vector.broadcast %cst_56 : f32 to vector<256x128xf32>
    %119 = arith.maximumf %117, %118 : vector<256x128xf32>
    %c0_57 = arith.constant 0 : index
    %c0_58 = arith.constant 0 : index
    %120 = vector.load %arg16[%c0_57, %c0_58] : memref<256x128xf32, #tpu.memory_space<vmem>>, vector<256x128xf32>
    tpu.vector_store %arg16[%c0_57, %c0_58], %119 {strides = array<i32>} : memref<256x128xf32, #tpu.memory_space<vmem>>, vector<256x128xf32>,
    return
  }
}

</mosaic_0001>

<llo_original>
// kernel: tpu_custom_call.1
$region0: #{tpu_custom_call.1}
  #allocation0 [shape = 'u32[]', space=smem, size = 0x4, offset = 0x4, fixed_abs, tag = 'smem constant byte address 0x4 - core index']
  #allocation1 [shape = 'u32[72,128]{1,0:T(1,128)}', space=vmem, size = 0x9000, scoped, tag = 'internal scratch']
  %s0 = inlined_call_operand.vmem [shape: f32[256,64], index: 0, kind: input, shape index: {}]
  %s1 = inlined_call_operand.vmem [shape: bf16[64,128], index: 1, kind: input, shape index: {}]
  %s2 = inlined_call_operand.vmem [shape: f32[1,128], index: 2, kind: input, shape index: {}]
  %s3 = inlined_call_operand.vmem [shape: f32[1,128], index: 3, kind: input, shape index: {}]
  %s4 = inlined_call_operand.vmem [shape: f32[1,128], index: 4, kind: input, shape index: {}]
  %s5 = inlined_call_operand.vmem [shape: bf16[128,128], index: 5, kind: input, shape index: {}]
  %s6 = inlined_call_operand.vmem [shape: f32[1,128], index: 6, kind: input, shape index: {}]
  %s7 = inlined_call_operand.vmem [shape: f32[1,128], index: 7, kind: input, shape index: {}]
  %s8 = inlined_call_operand.vmem [shape: f32[1,128], index: 8, kind: input, shape index: {}]
  %s9 = inlined_call_operand.vmem [shape: bf16[128,128], index: 9, kind: input, shape index: {}]
  %s10 = inlined_call_operand.vmem [shape: f32[1,128], index: 10, kind: input, shape index: {}]
  %s11 = inlined_call_operand.vmem [shape: f32[1,128], index: 11, kind: input, shape index: {}]
  %s12 = inlined_call_operand.vmem [shape: f32[1,128], index: 12, kind: input, shape index: {}]
  %s13 = inlined_call_operand.vmem [shape: bf16[64,128], index: 13, kind: input, shape index: {}]
  %s14 = inlined_call_operand.vmem [shape: f32[1,128], index: 14, kind: input, shape index: {}]
  %s15 = inlined_call_operand.vmem [shape: f32[1,128], index: 15, kind: input, shape index: {}]
  %s16 = inlined_call_operand.hbm [shape: f32[256,128], index: 16, kind: output, shape index: {}]
  %s17 = sld [smem:[#allocation0]]
  $region74: #{tpu_custom_call.1} parent=0
    _
  %s19 = ssub.s32 1, %s17
  %s20 = scalar_select 0, %s19, %s17
  $region1: #{tpu_custom_call.1} parent=0
    #allocation2 [shape = 'u8[131072]{0}', space=vmem, size = 0x20000, scoped, tag = 'output window, operand 0, single buffered']
    #allocation3 [shape = 's32[1]{0}', space=sflag, size = 0x4, scoped, tag = 'scoped memory for tpu_custom_call.1']
    %21 = vsyncpa [#allocation3], 0
    // Predicated region
    $region2: #{tpu_custom_call.1} parent=1 // pred_check
      _
    $region3: #{tpu_custom_call.1} parent=1 // pred_check_branch
      %23 = sbr.rel (0) target = $region5
    $region4: #{tpu_custom_call.1} parent=1 // pred_region
      _
    $region5: #{tpu_custom_call.1} parent=1 // pred_fallthru
      _
    // Predicated region
    $region6: #{tpu_custom_call.1} parent=1 // pred_check
      _
    $region7: #{tpu_custom_call.1} parent=1 // pred_check_branch
      %25 = sbr.rel (0) target = $region9
    $region8: #{tpu_custom_call.1} parent=1 // pred_region
      _
    $region9: #{tpu_custom_call.1} parent=1 // pred_fallthru
      _
    // Predicated region
    $region10: #{tpu_custom_call.1} parent=1 // pred_check
      _
    $region11: #{tpu_custom_call.1} parent=1 // pred_check_branch
      %27 = sbr.rel (0) target = $region13
    $region12: #{tpu_custom_call.1} parent=1 // pred_region
      _
    $region13: #{tpu_custom_call.1} parent=1 // pred_fallthru
      _
    // Predicated region
    $region14: #{tpu_custom_call.1} parent=1 // pred_check
      _
    $region15: #{tpu_custom_call.1} parent=1 // pred_check_branch
      %29 = sbr.rel (0) target = $region17
    $region16: #{tpu_custom_call.1} parent=1 // pred_region
      _
    $region17: #{tpu_custom_call.1} parent=1 // pred_fallthru
      _
    // Predicated region
    $region18: #{tpu_custom_call.1} parent=1 // pred_check
      _
    $region19: #{tpu_custom_call.1} parent=1 // pred_check_branch
      %31 = sbr.rel (0) target = $region21
    $region20: #{tpu_custom_call.1} parent=1 // pred_region
      _
    $region21: #{tpu_custom_call.1} parent=1 // pred_fallthru
      _
    // Predicated region
    $region22: #{tpu_custom_call.1} parent=1 // pred_check
      _
    $region23: #{tpu_custom_call.1} parent=1 // pred_check_branch
      %33 = sbr.rel (0) target = $region25
    $region24: #{tpu_custom_call.1} parent=1 // pred_region
      _
    $region25: #{tpu_custom_call.1} parent=1 // pred_fallthru
      _
    // Predicated region
    $region26: #{tpu_custom_call.1} parent=1 // pred_check
      _
    $region27: #{tpu_custom_call.1} parent=1 // pred_check_branch
      %35 = sbr.rel (0) target = $region29
    $region28: #{tpu_custom_call.1} parent=1 // pred_region
      _
    $region29: #{tpu_custom_call.1} parent=1 // pred_fallthru
      _
    // Predicated region
    $region30: #{tpu_custom_call.1} parent=1 // pred_check
      _
    $region31: #{tpu_custom_call.1} parent=1 // pred_check_branch
      %37 = sbr.rel (0) target = $region33
    $region32: #{tpu_custom_call.1} parent=1 // pred_region
      _
    $region33: #{tpu_custom_call.1} parent=1 // pred_fallthru
      _
    // Predicated region
    $region34: #{tpu_custom_call.1} parent=1 // pred_check
      _
    $region35: #{tpu_custom_call.1} parent=1 // pred_check_branch
      %39 = sbr.rel (0) target = $region37
    $region36: #{tpu_custom_call.1} parent=1 // pred_region
      _
    $region37: #{tpu_custom_call.1} parent=1 // pred_fallthru
      _
    // Predicated region
    $region38: #{tpu_custom_call.1} parent=1 // pred_check
      _
    $region39: #{tpu_custom_call.1} parent=1 // pred_check_branch
      %41 = sbr.rel (0) target = $region41
    $region40: #{tpu_custom_call.1} parent=1 // pred_region
      _
    $region41: #{tpu_custom_call.1} parent=1 // pred_fallthru
      _
    // Predicated region
    $region42: #{tpu_custom_call.1} parent=1 // pred_check
      _
    $region43: #{tpu_custom_call.1} parent=1 // pred_check_branch
      %43 = sbr.rel (0) target = $region45
    $region44: #{tpu_custom_call.1} parent=1 // pred_region
      _
    $region45: #{tpu_custom_call.1} parent=1 // pred_fallthru
      _
    // Predicated region
    $region46: #{tpu_custom_call.1} parent=1 // pred_check
      _
    $region47: #{tpu_custom_call.1} parent=1 // pred_check_branch
      %45 = sbr.rel (0) target = $region49
    $region48: #{tpu_custom_call.1} parent=1 // pred_region
      _
    $region49: #{tpu_custom_call.1} parent=1 // pred_fallthru
      _
    // Predicated region
    $region50: #{tpu_custom_call.1} parent=1 // pred_check
      _
    $region51: #{tpu_custom_call.1} parent=1 // pred_check_branch
      %47 = sbr.rel (0) target = $region53
    $region52: #{tpu_custom_call.1} parent=1 // pred_region
      _
    $region53: #{tpu_custom_call.1} parent=1 // pred_fallthru
      _
    // Predicated region
    $region54: #{tpu_custom_call.1} parent=1 // pred_check
      _
    $region55: #{tpu_custom_call.1} parent=1 // pred_check_branch
      %49 = sbr.rel (0) target = $region57
    $region56: #{tpu_custom_call.1} parent=1 // pred_region
      _
    $region57: #{tpu_custom_call.1} parent=1 // pred_fallthru
      _
    // Predicated region
    $region58: #{tpu_custom_call.1} parent=1 // pred_check
      _
    $region59: #{tpu_custom_call.1} parent=1 // pred_check_branch
      %51 = sbr.rel (0) target = $region61
    $region60: #{tpu_custom_call.1} parent=1 // pred_region
      _
    $region61: #{tpu_custom_call.1} parent=1 // pred_fallthru
      _
    // Predicated region
    $region62: #{tpu_custom_call.1} parent=1 // pred_check
      _
    $region63: #{tpu_custom_call.1} parent=1 // pred_check_branch
      %53 = sbr.rel (0) target = $region65
    $region64: #{tpu_custom_call.1} parent=1 // pred_region
      _
    $region65: #{tpu_custom_call.1} parent=1 // pred_fallthru
      _
    %v55 = vld [vmem:[%s0] sm:$0xff]
    %v56 = vld [vmem:[%s0 + $0x8] sm:$0xff]
    %v57 = vld [vmem:[%s0 + $0x10] sm:$0xff]
    %v58 = vld [vmem:[%s0 + $0x18] sm:$0xff]
    %v59 = vld [vmem:[%s0 + $0x20] sm:$0xff]
    %v60 = vld [vmem:[%s0 + $0x28] sm:$0xff]
    %v61 = vld [vmem:[%s0 + $0x30] sm:$0xff]
    %v62 = vld [vmem:[%s0 + $0x38] sm:$0xff]
    %v63 = vld [vmem:[%s0 + $0x40] sm:$0xff]
    %v64 = vld [vmem:[%s0 + $0x48] sm:$0xff]
    %v65 = vld [vmem:[%s0 + $0x50] sm:$0xff]
    %v66 = vld [vmem:[%s0 + $0x58] sm:$0xff]
    %v67 = vld [vmem:[%s0 + $0x60] sm:$0xff]
    %v68 = vld [vmem:[%s0 + $0x68] sm:$0xff]
    %v69 = vld [vmem:[%s0 + $0x70] sm:$0xff]
    %v70 = vld [vmem:[%s0 + $0x78] sm:$0xff]
    %v71 = vld [vmem:[%s0 + $0x80] sm:$0xff]
    %v72 = vld [vmem:[%s0 + $0x88] sm:$0xff]
    %v73 = vld [vmem:[%s0 + $0x90] sm:$0xff]
    %v74 = vld [vmem:[%s0 + $0x98] sm:$0xff]
    %v75 = vld [vmem:[%s0 + $0xa0] sm:$0xff]
    %v76 = vld [vmem:[%s0 + $0xa8] sm:$0xff]
    %v77 = vld [vmem:[%s0 + $0xb0] sm:$0xff]
    %v78 = vld [vmem:[%s0 + $0xb8] sm:$0xff]
    %v79 = vld [vmem:[%s0 + $0xc0] sm:$0xff]
    %v80 = vld [vmem:[%s0 + $0xc8] sm:$0xff]
    %v81 = vld [vmem:[%s0 + $0xd0] sm:$0xff]
    %v82 = vld [vmem:[%s0 + $0xd8] sm:$0xff]
    %v83 = vld [vmem:[%s0 + $0xe0] sm:$0xff]
    %v84 = vld [vmem:[%s0 + $0xe8] sm:$0xff]
    %v85 = vld [vmem:[%s0 + $0xf0] sm:$0xff]
    %v86 = vld [vmem:[%s0 + $0xf8] sm:$0xff]
    %v87 = vpack.c.bf16 %v56, %v55
    %v88 = vpack.c.bf16 %v58, %v57
    %v89 = vpack.c.bf16 %v60, %v59
    %v90 = vpack.c.bf16 %v62, %v61
    %v91 = vpack.c.bf16 %v64, %v63
    %v92 = vpack.c.bf16 %v66, %v65
    %v93 = vpack.c.bf16 %v68, %v67
    %v94 = vpack.c.bf16 %v70, %v69
    %v95 = vpack.c.bf16 %v72, %v71
    %v96 = vpack.c.bf16 %v74, %v73
    %v97 = vpack.c.bf16 %v76, %v75
    %v98 = vpack.c.bf16 %v78, %v77
    %v99 = vpack.c.bf16 %v80, %v79
    %v100 = vpack.c.bf16 %v82, %v81
    %v101 = vpack.c.bf16 %v84, %v83
    %v102 = vpack.c.bf16 %v86, %v85
    %v103 = vld [vmem:[%s2] sm:$0x1]
    %v104 = vld [vmem:[%s3] sm:$0x1]
    %v105 = vld [vmem:[%s4] sm:$0x1]
    %v106 = vld [vmem:[%s1] sm:$0xf]
    %v107 = vld [vmem:[%s1 + $0x4] sm:$0xf]
    %v108 = vld [vmem:[%s1 + $0x8] sm:$0xf]
    %v109 = vld [vmem:[%s1 + $0xc] sm:$0xf]
    %v110 = vld [vmem:[%s1 + $0x10] sm:$0xf]
    %v111 = vld [vmem:[%s1 + $0x14] sm:$0xf]
    %v112 = vld [vmem:[%s1 + $0x18] sm:$0xf]
    %v113 = vld [vmem:[%s1 + $0x1c] sm:$0xf]
    %v115 = vperm.slane %v103, 0
    %v125 = vunpack.c.l.b16 %v106
    %v126 = vunpack.c.l.b16 %v107
    %v127 = vunpack.c.l.b16 %v108
    %v128 = vunpack.c.l.b16 %v109
    %v129 = vunpack.c.l.b16 %v110
    %v130 = vunpack.c.l.b16 %v111
    %v131 = vunpack.c.l.b16 %v112
    %v132 = vunpack.c.l.b16 %v113
    %v133 = vpack.c.b16 %v126, %v125
    %v134 = vpack.c.b16 %v128, %v127
    %v135 = vpack.c.b16 %v130, %v129
    %v136 = vpack.c.b16 %v132, %v131
    %vm141 = vcmask 523264
    %v143 = vsel %vm141, %v87, 0
    %v146 = vsel %vm141, %v88, 0
    %v149 = vsel %vm141, %v89, 0
    %v152 = vsel %vm141, %v90, 0
    %v155 = vsel %vm141, %v91, 0
    %v158 = vsel %vm141, %v92, 0
    %v161 = vsel %vm141, %v93, 0
    %v164 = vsel %vm141, %v94, 0
    %v167 = vsel %vm141, %v95, 0
    %v170 = vsel %vm141, %v96, 0
    %v173 = vsel %vm141, %v97, 0
    %v176 = vsel %vm141, %v98, 0
    %v179 = vsel %vm141, %v99, 0
    %v182 = vsel %vm141, %v100, 0
    %v185 = vsel %vm141, %v101, 0
    %v188 = vsel %vm141, %v102, 0
    %190 = vmatpush.bf16.msra.mxu0 0
    %191 = vmatpush.bf16.msra.mxu0 0
    %192 = vmatpush.bf16.msra.mxu0 0
    %193 = vmatpush.bf16.msra.mxu0 0
    %194 = vmatpush.bf16.msra.mxu0 %v136
    %195 = vmatpush.bf16.msra.mxu0 %v135
    %196 = vmatpush.bf16.msra.mxu0 %v134
    %197 = vmatpush.bf16.msra.mxu0 %v133
    %198 = vmatmul.bf16.gmra.mxu0 %v143
    %v199 = vpop.f32.mrf.mxu0
    %v200 = vadd.f32 %v115, %v199
    %v201 = vpop.f32.mrf.mxu0
    %v202 = vadd.f32 %v115, %v201
    %203 = vmatmul.bf16.gmra.mxu0 %v146
    %v204 = vpop.f32.mrf.mxu0
    %v205 = vadd.f32 %v115, %v204
    %v206 = vpop.f32.mrf.mxu0
    %v207 = vadd.f32 %v115, %v206
    %208 = vmatmul.bf16.gmra.mxu0 %v149
    %v209 = vpop.f32.mrf.mxu0
    %v210 = vadd.f32 %v115, %v209
    %v211 = vpop.f32.mrf.mxu0
    %v212 = vadd.f32 %v115, %v211
    %213 = vmatmul.bf16.gmra.mxu0 %v152
    %v214 = vpop.f32.mrf.mxu0
    %v215 = vadd.f32 %v115, %v214
    %v216 = vpop.f32.mrf.mxu0
    %v217 = vadd.f32 %v115, %v216
    %218 = vmatmul.bf16.gmra.mxu0 %v155
    %v219 = vpop.f32.mrf.mxu0
    %v220 = vadd.f32 %v115, %v219
    %v221 = vpop.f32.mrf.mxu0
    %v222 = vadd.f32 %v115, %v221
    %223 = vmatmul.bf16.gmra.mxu0 %v158
    %v224 = vpop.f32.mrf.mxu0
    %v225 = vadd.f32 %v115, %v224
    %v226 = vpop.f32.mrf.mxu0
    %v227 = vadd.f32 %v115, %v226
    %228 = vmatmul.bf16.gmra.mxu0 %v161
    %v229 = vpop.f32.mrf.mxu0
    %v230 = vadd.f32 %v115, %v229
    %v231 = vpop.f32.mrf.mxu0
    %v232 = vadd.f32 %v115, %v231
    %233 = vmatmul.bf16.gmra.mxu0 %v164
    %v234 = vpop.f32.mrf.mxu0
    %v235 = vadd.f32 %v115, %v234
    %v236 = vpop.f32.mrf.mxu0
    %v237 = vadd.f32 %v115, %v236
    %238 = vmatmul.bf16.gmra.mxu0 %v167
    %v239 = vpop.f32.mrf.mxu0
    %v240 = vadd.f32 %v115, %v239
    %v241 = vpop.f32.mrf.mxu0
    %v242 = vadd.f32 %v115, %v241
    %243 = vmatmul.bf16.gmra.mxu0 %v170
    %v244 = vpop.f32.mrf.mxu0
    %v245 = vadd.f32 %v115, %v244
    %v246 = vpop.f32.mrf.mxu0
    %v247 = vadd.f32 %v115, %v246
    %248 = vmatmul.bf16.gmra.mxu0 %v173
    %v249 = vpop.f32.mrf.mxu0
    %v250 = vadd.f32 %v115, %v249
    %v251 = vpop.f32.mrf.mxu0
    %v252 = vadd.f32 %v115, %v251
    %253 = vmatmul.bf16.gmra.mxu0 %v176
    %v254 = vpop.f32.mrf.mxu0
    %v255 = vadd.f32 %v115, %v254
    %v256 = vpop.f32.mrf.mxu0
    %v257 = vadd.f32 %v115, %v256
    %258 = vmatmul.bf16.gmra.mxu0 %v179
    %v259 = vpop.f32.mrf.mxu0
    %v260 = vadd.f32 %v115, %v259
    %v261 = vpop.f32.mrf.mxu0
    %v262 = vadd.f32 %v115, %v261
    %263 = vmatmul.bf16.gmra.mxu0 %v182
    %v264 = vpop.f32.mrf.mxu0
    %v265 = vadd.f32 %v115, %v264
    %v266 = vpop.f32.mrf.mxu0
    %v267 = vadd.f32 %v115, %v266
    %268 = vmatmul.bf16.gmra.mxu0 %v185
    %v269 = vpop.f32.mrf.mxu0
    %v270 = vadd.f32 %v115, %v269
    %v271 = vpop.f32.mrf.mxu0
    %v272 = vadd.f32 %v115, %v271
    %273 = vmatmul.bf16.gmra.mxu0 %v188
    %v274 = vpop.f32.mrf.mxu0
    %v275 = vadd.f32 %v115, %v274
    %v276 = vpop.f32.mrf.mxu0
    %v277 = vadd.f32 %v115, %v276
    %278 = vdwg.mxu0
    %v279 = vadd.f32 %v200, %v202
    %v280 = vadd.f32 %v279, %v205
    %v281 = vadd.f32 %v280, %v207
    %v282 = vadd.f32 %v281, %v210
    %v283 = vadd.f32 %v282, %v212
    %v284 = vadd.f32 %v283, %v215
    %v285 = vadd.f32 %v284, %v217
    %v286 = vadd.f32 %v285, %v220
    %v287 = vadd.f32 %v286, %v222
    %v288 = vadd.f32 %v287, %v225
    %v289 = vadd.f32 %v288, %v227
    %v290 = vadd.f32 %v289, %v230
    %v291 = vadd.f32 %v290, %v232
    %v292 = vadd.f32 %v291, %v235
    %v293 = vadd.f32 %v292, %v237
    %v294 = vadd.f32 %v293, %v240
    %v295 = vadd.f32 %v294, %v242
    %v296 = vadd.f32 %v295, %v245
    %v297 = vadd.f32 %v296, %v247
    %v298 = vadd.f32 %v297, %v250
    %v299 = vadd.f32 %v298, %v252
    %v300 = vadd.f32 %v299, %v255
    %v301 = vadd.f32 %v300, %v257
    %v302 = vadd.f32 %v301, %v260
    %v303 = vadd.f32 %v302, %v262
    %v304 = vadd.f32 %v303, %v265
    %v305 = vadd.f32 %v304, %v267
    %v306 = vadd.f32 %v305, %v270
    %v307 = vadd.f32 %v306, %v272
    %v308 = vadd.f32 %v307, %v275
    %v309 = vadd.f32 %v308, %v277
    %v310 = vrot.slane %v309, 4
    %v311 = vadd.f32 %v309, %v310
    %v312 = vrot.slane %v311, 2
    %v313 = vadd.f32 %v311, %v312
    %v314 = vrot.slane %v313, 1
    %v315 = vadd.f32 %v313, %v314
    %v316 = vrcp.pop 256.0
    %v317 = vmul.f32 256.0, %v316
    %v318 = vsub.f32 1.0, %v317
    %v319 = vmul.f32 %v316, %v318
    %v320 = vadd.f32 %v316, %v319
    %vm321 = vweird.f32 %v316
    %v322 = vsel %vm321, %v316, %v320
    %v323 = vmul.f32 %v315, %v322
    %v324 = vsub.f32 %v200, %v323
    %v325 = vsub.f32 %v202, %v323
    %v326 = vsub.f32 %v205, %v323
    %v327 = vsub.f32 %v207, %v323
    %v328 = vsub.f32 %v210, %v323
    %v329 = vsub.f32 %v212, %v323
    %v330 = vsub.f32 %v215, %v323
    %v331 = vsub.f32 %v217, %v323
    %v332 = vsub.f32 %v220, %v323
    %v333 = vsub.f32 %v222, %v323
    %v334 = vsub.f32 %v225, %v323
    %v335 = vsub.f32 %v227, %v323
    %v336 = vsub.f32 %v230, %v323
    %v337 = vsub.f32 %v232, %v323
    %v338 = vsub.f32 %v235, %v323
    %v339 = vsub.f32 %v237, %v323
    %v340 = vsub.f32 %v240, %v323
    %v341 = vsub.f32 %v242, %v323
    %v342 = vsub.f32 %v245, %v323
    %v343 = vsub.f32 %v247, %v323
    %v344 = vsub.f32 %v250, %v323
    %v345 = vsub.f32 %v252, %v323
    %v346 = vsub.f32 %v255, %v323
    %v347 = vsub.f32 %v257, %v323
    %v348 = vsub.f32 %v260, %v323
    %v349 = vsub.f32 %v262, %v323
    %v350 = vsub.f32 %v265, %v323
    %v351 = vsub.f32 %v267, %v323
    %v352 = vsub.f32 %v270, %v323
    %v353 = vsub.f32 %v272, %v323
    %v354 = vsub.f32 %v275, %v323
    %v355 = vsub.f32 %v277, %v323
    %v356 = vmul.f32 %v324, %v324
    %v357 = vmul.f32 %v325, %v325
    %v358 = vmul.f32 %v326, %v326
    %v359 = vmul.f32 %v327, %v327
    %v360 = vmul.f32 %v328, %v328
    %v361 = vmul.f32 %v329, %v329
    %v362 = vmul.f32 %v330, %v330
    %v363 = vmul.f32 %v331, %v331
    %v364 = vmul.f32 %v332, %v332
    %v365 = vmul.f32 %v333, %v333
    %v366 = vmul.f32 %v334, %v334
    %v367 = vmul.f32 %v335, %v335
    %v368 = vmul.f32 %v336, %v336
    %v369 = vmul.f32 %v337, %v337
    %v370 = vmul.f32 %v338, %v338
    %v371 = vmul.f32 %v339, %v339
    %v372 = vmul.f32 %v340, %v340
    %v373 = vmul.f32 %v341, %v341
    %v374 = vmul.f32 %v342, %v342
    %v375 = vmul.f32 %v343, %v343
    %v376 = vmul.f32 %v344, %v344
    %v377 = vmul.f32 %v345, %v345
    %v378 = vmul.f32 %v346, %v346
    %v379 = vmul.f32 %v347, %v347
    %v380 = vmul.f32 %v348, %v348
    %v381 = vmul.f32 %v349, %v349
    %v382 = vmul.f32 %v350, %v350
    %v383 = vmul.f32 %v351, %v351
    %v384 = vmul.f32 %v352, %v352
    %v385 = vmul.f32 %v353, %v353
    %v386 = vmul.f32 %v354, %v354
    %v387 = vmul.f32 %v355, %v355
    %v388 = vadd.f32 %v356, %v357
    %v389 = vadd.f32 %v388, %v358
    %v390 = vadd.f32 %v389, %v359
    %v391 = vadd.f32 %v390, %v360
    %v392 = vadd.f32 %v391, %v361
    %v393 = vadd.f32 %v392, %v362
    %v394 = vadd.f32 %v393, %v363
    %v395 = vadd.f32 %v394, %v364
    %v396 = vadd.f32 %v395, %v365
    %v397 = vadd.f32 %v396, %v366
    %v398 = vadd.f32 %v397, %v367
    %v399 = vadd.f32 %v398, %v368
    %v400 = vadd.f32 %v399, %v369
    %v401 = vadd.f32 %v400, %v370
    %v402 = vadd.f32 %v401, %v371
    %v403 = vadd.f32 %v402, %v372
    %v404 = vadd.f32 %v403, %v373
    %v405 = vadd.f32 %v404, %v374
    %v406 = vadd.f32 %v405, %v375
    %v407 = vadd.f32 %v406, %v376
    %v408 = vadd.f32 %v407, %v377
    %v409 = vadd.f32 %v408, %v378
    %v410 = vadd.f32 %v409, %v379
    %v411 = vadd.f32 %v410, %v380
    %v412 = vadd.f32 %v411, %v381
    %v413 = vadd.f32 %v412, %v382
    %v414 = vadd.f32 %v413, %v383
    %v415 = vadd.f32 %v414, %v384
    %v416 = vadd.f32 %v415, %v385
    %v417 = vadd.f32 %v416, %v386
    %v418 = vadd.f32 %v417, %v387
    %v419 = vrot.slane %v418, 4
    %v420 = vadd.f32 %v418, %v419
    %v421 = vrot.slane %v420, 2
    %v422 = vadd.f32 %v420, %v421
    %v423 = vrot.slane %v422, 1
    %v424 = vadd.f32 %v422, %v423
    %v425 = vmul.f32 %v424, %v322
    %v426 = vadd.f32 %v425, 1e-05
    %v427 = vrsqrt.pop %v426
    %v428 = vmul.f32 %v427, %v426
    %v429 = vmul.f32 %v428, %v427
    %v430 = vmul.f32 0.5, %v429
    %v431 = vsub.f32 1.5, %v430
    %v432 = vmul.f32 %v427, %v431
    %vm433 = vweird.f32 %v426
    %vm434 = vweird.f32 %v427
    %vm435 = vmor %vm433, %vm434
    %v436 = vsel %vm435, %v427, %v432
    %v437 = vmul.f32 %v104, %v436
    %v438 = vmul.f32 %v323, %v437
    %v439 = vsub.f32 %v105, %v438
    %v441 = vperm.slane %v437, 0
    %v443 = vmul.f32 %v200, %v441
    %v444 = vmul.f32 %v202, %v441
    %v445 = vmul.f32 %v205, %v441
    %v446 = vmul.f32 %v207, %v441
    %v447 = vmul.f32 %v210, %v441
    %v448 = vmul.f32 %v212, %v441
    %v449 = vmul.f32 %v215, %v441
    %v450 = vmul.f32 %v217, %v441
    %v451 = vmul.f32 %v220, %v441
    %v452 = vmul.f32 %v222, %v441
    %v453 = vmul.f32 %v225, %v441
    %v454 = vmul.f32 %v227, %v441
    %v455 = vmul.f32 %v230, %v441
    %v456 = vmul.f32 %v232, %v441
    %v457 = vmul.f32 %v235, %v441
    %v458 = vmul.f32 %v237, %v441
    %v459 = vmul.f32 %v240, %v441
    %v460 = vmul.f32 %v242, %v441
    %v461 = vmul.f32 %v245, %v441
    %v462 = vmul.f32 %v247, %v441
    %v463 = vmul.f32 %v250, %v441
    %v464 = vmul.f32 %v252, %v441
    %v465 = vmul.f32 %v255, %v441
    %v466 = vmul.f32 %v257, %v441
    %v467 = vmul.f32 %v260, %v441
    %v468 = vmul.f32 %v262, %v441
    %v469 = vmul.f32 %v265, %v441
    %v470 = vmul.f32 %v267, %v441
    %v471 = vmul.f32 %v270, %v441
    %v472 = vmul.f32 %v272, %v441
    %v473 = vmul.f32 %v275, %v441
    %v474 = vmul.f32 %v277, %v441
    %v476 = vperm.slane %v439, 0
    %v478 = vadd.f32 %v443, %v476
    %v479 = vadd.f32 %v444, %v476
    %v480 = vadd.f32 %v445, %v476
    %v481 = vadd.f32 %v446, %v476
    %v482 = vadd.f32 %v447, %v476
    %v483 = vadd.f32 %v448, %v476
    %v484 = vadd.f32 %v449, %v476
    %v485 = vadd.f32 %v450, %v476
    %v486 = vadd.f32 %v451, %v476
    %v487 = vadd.f32 %v452, %v476
    %v488 = vadd.f32 %v453, %v476
    %v489 = vadd.f32 %v454, %v476
    %v490 = vadd.f32 %v455, %v476
    %v491 = vadd.f32 %v456, %v476
    %v492 = vadd.f32 %v457, %v476
    %v493 = vadd.f32 %v458, %v476
    %v494 = vadd.f32 %v459, %v476
    %v495 = vadd.f32 %v460, %v476
    %v496 = vadd.f32 %v461, %v476
    %v497 = vadd.f32 %v462, %v476
    %v498 = vadd.f32 %v463, %v476
    %v499 = vadd.f32 %v464, %v476
    %v500 = vadd.f32 %v465, %v476
    %v501 = vadd.f32 %v466, %v476
    %v502 = vadd.f32 %v467, %v476
    %v503 = vadd.f32 %v468, %v476
    %v504 = vadd.f32 %v469, %v476
    %v505 = vadd.f32 %v470, %v476
    %v506 = vadd.f32 %v471, %v476
    %v507 = vadd.f32 %v472, %v476
    %v508 = vadd.f32 %v473, %v476
    %v509 = vadd.f32 %v474, %v476
    %v510 = vmax.f32 %v478, 0.0
    %v511 = vmax.f32 %v479, 0.0
    %v512 = vmax.f32 %v480, 0.0
    %v513 = vmax.f32 %v481, 0.0
    %v514 = vmax.f32 %v482, 0.0
    %v515 = vmax.f32 %v483, 0.0
    %v516 = vmax.f32 %v484, 0.0
    %v517 = vmax.f32 %v485, 0.0
    %v518 = vmax.f32 %v486, 0.0
    %v519 = vmax.f32 %v487, 0.0
    %v520 = vmax.f32 %v488, 0.0
    %v521 = vmax.f32 %v489, 0.0
    %v522 = vmax.f32 %v490, 0.0
    %v523 = vmax.f32 %v491, 0.0
    %v524 = vmax.f32 %v492, 0.0
    %v525 = vmax.f32 %v493, 0.0
    %v526 = vmax.f32 %v494, 0.0
    %v527 = vmax.f32 %v495, 0.0
    %v528 = vmax.f32 %v496, 0.0
    %v529 = vmax.f32 %v497, 0.0
    %v530 = vmax.f32 %v498, 0.0
    %v531 = vmax.f32 %v499, 0.0
    %v532 = vmax.f32 %v500, 0.0
    %v533 = vmax.f32 %v501, 0.0
    %v534 = vmax.f32 %v502, 0.0
    %v535 = vmax.f32 %v503, 0.0
    %v536 = vmax.f32 %v504, 0.0
    %v537 = vmax.f32 %v505, 0.0
    %v538 = vmax.f32 %v506, 0.0
    %v539 = vmax.f32 %v507, 0.0
    %v540 = vmax.f32 %v508, 0.0
    %v541 = vmax.f32 %v509, 0.0
    %v542 = vpack.c.bf16 %v511, %v510
    %v543 = vpack.c.bf16 %v513, %v512
    %v544 = vpack.c.bf16 %v515, %v514
    %v545 = vpack.c.bf16 %v517, %v516
    %v546 = vpack.c.bf16 %v519, %v518
    %v547 = vpack.c.bf16 %v521, %v520
    %v548 = vpack.c.bf16 %v523, %v522
    %v549 = vpack.c.bf16 %v525, %v524
    %v550 = vpack.c.bf16 %v527, %v526
    %v551 = vpack.c.bf16 %v529, %v528
    %v552 = vpack.c.bf16 %v531, %v530
    %v553 = vpack.c.bf16 %v533, %v532
    %v554 = vpack.c.bf16 %v535, %v534
    %v555 = vpack.c.bf16 %v537, %v536
    %v556 = vpack.c.bf16 %v539, %v538
    %v557 = vpack.c.bf16 %v541, %v540
    %v558 = vld [vmem:[%s6] sm:$0x1]
    %v559 = vld [vmem:[%s7] sm:$0x1]
    %v560 = vld [vmem:[%s8] sm:$0x1]
    %v561 = vld [vmem:[%s5] sm:$0xf]
    %v562 = vld [vmem:[%s5 + $0x4] sm:$0xf]
    %v563 = vld [vmem:[%s5 + $0x8] sm:$0xf]
    %v564 = vld [vmem:[%s5 + $0xc] sm:$0xf]
    %v565 = vld [vmem:[%s5 + $0x10] sm:$0xf]
    %v566 = vld [vmem:[%s5 + $0x14] sm:$0xf]
    %v567 = vld [vmem:[%s5 + $0x18] sm:$0xf]
    %v568 = vld [vmem:[%s5 + $0x1c] sm:$0xf]
    %v569 = vld [vmem:[%s5 + $0x20] sm:$0xf]
    %v570 = vld [vmem:[%s5 + $0x24] sm:$0xf]
    %v571 = vld [vmem:[%s5 + $0x28] sm:$0xf]
    %v572 = vld [vmem:[%s5 + $0x2c] sm:$0xf]
    %v573 = vld [vmem:[%s5 + $0x30] sm:$0xf]
    %v574 = vld [vmem:[%s5 + $0x34] sm:$0xf]
    %v575 = vld [vmem:[%s5 + $0x38] sm:$0xf]
    %v576 = vld [vmem:[%s5 + $0x3c] sm:$0xf]
    %v578 = vperm.slane %v558, 0
    %v596 = vunpack.c.l.b16 %v561
    %v597 = vunpack.c.l.b16 %v562
    %v598 = vunpack.c.l.b16 %v563
    %v599 = vunpack.c.l.b16 %v564
    %v600 = vunpack.c.l.b16 %v565
    %v601 = vunpack.c.l.b16 %v566
    %v602 = vunpack.c.l.b16 %v567
    %v603 = vunpack.c.l.b16 %v568
    %v604 = vunpack.c.l.b16 %v569
    %v605 = vunpack.c.l.b16 %v570
    %v606 = vunpack.c.l.b16 %v571
    %v607 = vunpack.c.l.b16 %v572
    %v608 = vunpack.c.l.b16 %v573
    %v609 = vunpack.c.l.b16 %v574
    %v610 = vunpack.c.l.b16 %v575
    %v611 = vunpack.c.l.b16 %v576
    %v612 = vpack.c.b16 %v597, %v596
    %v613 = vpack.c.b16 %v599, %v598
    %v614 = vpack.c.b16 %v601, %v600
    %v615 = vpack.c.b16 %v603, %v602
    %v616 = vpack.c.b16 %v605, %v604
    %v617 = vpack.c.b16 %v607, %v606
    %v618 = vpack.c.b16 %v609, %v608
    %v619 = vpack.c.b16 %v611, %v610
    %628 = vmatpush.bf16.msra.mxu0 %v619
    %629 = vmatpush.bf16.msra.mxu0 %v618
    %630 = vmatpush.bf16.msra.mxu0 %v617
    %631 = vmatpush.bf16.msra.mxu0 %v616
    %632 = vmatpush.bf16.msra.mxu0 %v615
    %633 = vmatpush.bf16.msra.mxu0 %v614
    %634 = vmatpush.bf16.msra.mxu0 %v613
    %635 = vmatpush.bf16.msra.mxu0 %v612
    %636 = vmatmul.bf16.gmra.mxu0 %v542
    %v637 = vpop.f32.mrf.mxu0
    %v638 = vadd.f32 %v578, %v637
    %v639 = vpop.f32.mrf.mxu0
    %v640 = vadd.f32 %v578, %v639
    %641 = vmatmul.bf16.gmra.mxu0 %v543
    %v642 = vpop.f32.mrf.mxu0
    %v643 = vadd.f32 %v578, %v642
    %v644 = vpop.f32.mrf.mxu0
    %v645 = vadd.f32 %v578, %v644
    %646 = vmatmul.bf16.gmra.mxu0 %v544
    %v647 = vpop.f32.mrf.mxu0
    %v648 = vadd.f32 %v578, %v647
    %v649 = vpop.f32.mrf.mxu0
    %v650 = vadd.f32 %v578, %v649
    %651 = vmatmul.bf16.gmra.mxu0 %v545
    %v652 = vpop.f32.mrf.mxu0
    %v653 = vadd.f32 %v578, %v652
    %v654 = vpop.f32.mrf.mxu0
    %v655 = vadd.f32 %v578, %v654
    %656 = vmatmul.bf16.gmra.mxu0 %v546
    %v657 = vpop.f32.mrf.mxu0
    %v658 = vadd.f32 %v578, %v657
    %v659 = vpop.f32.mrf.mxu0
    %v660 = vadd.f32 %v578, %v659
    %661 = vmatmul.bf16.gmra.mxu0 %v547
    %v662 = vpop.f32.mrf.mxu0
    %v663 = vadd.f32 %v578, %v662
    %v664 = vpop.f32.mrf.mxu0
    %v665 = vadd.f32 %v578, %v664
    %666 = vmatmul.bf16.gmra.mxu0 %v548
    %v667 = vpop.f32.mrf.mxu0
    %v668 = vadd.f32 %v578, %v667
    %v669 = vpop.f32.mrf.mxu0
    %v670 = vadd.f32 %v578, %v669
    %671 = vmatmul.bf16.gmra.mxu0 %v549
    %v672 = vpop.f32.mrf.mxu0
    %v673 = vadd.f32 %v578, %v672
    %v674 = vpop.f32.mrf.mxu0
    %v675 = vadd.f32 %v578, %v674
    %676 = vmatmul.bf16.gmra.mxu0 %v550
    %v677 = vpop.f32.mrf.mxu0
    %v678 = vadd.f32 %v578, %v677
    %v679 = vpop.f32.mrf.mxu0
    %v680 = vadd.f32 %v578, %v679
    %681 = vmatmul.bf16.gmra.mxu0 %v551
    %v682 = vpop.f32.mrf.mxu0
    %v683 = vadd.f32 %v578, %v682
    %v684 = vpop.f32.mrf.mxu0
    %v685 = vadd.f32 %v578, %v684
    %686 = vmatmul.bf16.gmra.mxu0 %v552
    %v687 = vpop.f32.mrf.mxu0
    %v688 = vadd.f32 %v578, %v687
    %v689 = vpop.f32.mrf.mxu0
    %v690 = vadd.f32 %v578, %v689
    %691 = vmatmul.bf16.gmra.mxu0 %v553
    %v692 = vpop.f32.mrf.mxu0
    %v693 = vadd.f32 %v578, %v692
    %v694 = vpop.f32.mrf.mxu0
    %v695 = vadd.f32 %v578, %v694
    %696 = vmatmul.bf16.gmra.mxu0 %v554
    %v697 = vpop.f32.mrf.mxu0
    %v698 = vadd.f32 %v578, %v697
    %v699 = vpop.f32.mrf.mxu0
    %v700 = vadd.f32 %v578, %v699
    %701 = vmatmul.bf16.gmra.mxu0 %v555
    %v702 = vpop.f32.mrf.mxu0
    %v703 = vadd.f32 %v578, %v702
    %v704 = vpop.f32.mrf.mxu0
    %v705 = vadd.f32 %v578, %v704
    %706 = vmatmul.bf16.gmra.mxu0 %v556
    %v707 = vpop.f32.mrf.mxu0
    %v708 = vadd.f32 %v578, %v707
    %v709 = vpop.f32.mrf.mxu0
    %v710 = vadd.f32 %v578, %v709
    %711 = vmatmul.bf16.gmra.mxu0 %v557
    %v712 = vpop.f32.mrf.mxu0
    %v713 = vadd.f32 %v578, %v712
    %v714 = vpop.f32.mrf.mxu0
    %v715 = vadd.f32 %v578, %v714
    %716 = vdwg.mxu0
    %v717 = vadd.f32 %v638, %v640
    %v718 = vadd.f32 %v717, %v643
    %v719 = vadd.f32 %v718, %v645
    %v720 = vadd.f32 %v719, %v648
    %v721 = vadd.f32 %v720, %v650
    %v722 = vadd.f32 %v721, %v653
    %v723 = vadd.f32 %v722, %v655
    %v724 = vadd.f32 %v723, %v658
    %v725 = vadd.f32 %v724, %v660
    %v726 = vadd.f32 %v725, %v663
    %v727 = vadd.f32 %v726, %v665
    %v728 = vadd.f32 %v727, %v668
    %v729 = vadd.f32 %v728, %v670
    %v730 = vadd.f32 %v729, %v673
    %v731 = vadd.f32 %v730, %v675
    %v732 = vadd.f32 %v731, %v678
    %v733 = vadd.f32 %v732, %v680
    %v734 = vadd.f32 %v733, %v683
    %v735 = vadd.f32 %v734, %v685
    %v736 = vadd.f32 %v735, %v688
    %v737 = vadd.f32 %v736, %v690
    %v738 = vadd.f32 %v737, %v693
    %v739 = vadd.f32 %v738, %v695
    %v740 = vadd.f32 %v739, %v698
    %v741 = vadd.f32 %v740, %v700
    %v742 = vadd.f32 %v741, %v703
    %v743 = vadd.f32 %v742, %v705
    %v744 = vadd.f32 %v743, %v708
    %v745 = vadd.f32 %v744, %v710
    %v746 = vadd.f32 %v745, %v713
    %v747 = vadd.f32 %v746, %v715
    %v748 = vrot.slane %v747, 4
    %v749 = vadd.f32 %v747, %v748
    %v750 = vrot.slane %v749, 2
    %v751 = vadd.f32 %v749, %v750
    %v752 = vrot.slane %v751, 1
    %v753 = vadd.f32 %v751, %v752
    %v754 = vmul.f32 %v753, %v322
    %v755 = vsub.f32 %v638, %v754
    %v756 = vsub.f32 %v640, %v754
    %v757 = vsub.f32 %v643, %v754
    %v758 = vsub.f32 %v645, %v754
    %v759 = vsub.f32 %v648, %v754
    %v760 = vsub.f32 %v650, %v754
    %v761 = vsub.f32 %v653, %v754
    %v762 = vsub.f32 %v655, %v754
    %v763 = vsub.f32 %v658, %v754
    %v764 = vsub.f32 %v660, %v754
    %v765 = vsub.f32 %v663, %v754
    %v766 = vsub.f32 %v665, %v754
    %v767 = vsub.f32 %v668, %v754
    %v768 = vsub.f32 %v670, %v754
    %v769 = vsub.f32 %v673, %v754
    %v770 = vsub.f32 %v675, %v754
    %v771 = vsub.f32 %v678, %v754
    %v772 = vsub.f32 %v680, %v754
    %v773 = vsub.f32 %v683, %v754
    %v774 = vsub.f32 %v685, %v754
    %v775 = vsub.f32 %v688, %v754
    %v776 = vsub.f32 %v690, %v754
    %v777 = vsub.f32 %v693, %v754
    %v778 = vsub.f32 %v695, %v754
    %v779 = vsub.f32 %v698, %v754
    %v780 = vsub.f32 %v700, %v754
    %v781 = vsub.f32 %v703, %v754
    %v782 = vsub.f32 %v705, %v754
    %v783 = vsub.f32 %v708, %v754
    %v784 = vsub.f32 %v710, %v754
    %v785 = vsub.f32 %v713, %v754
    %v786 = vsub.f32 %v715, %v754
    %v787 = vmul.f32 %v755, %v755
    %v788 = vmul.f32 %v756, %v756
    %v789 = vmul.f32 %v757, %v757
    %v790 = vmul.f32 %v758, %v758
    %v791 = vmul.f32 %v759, %v759
    %v792 = vmul.f32 %v760, %v760
    %v793 = vmul.f32 %v761, %v761
    %v794 = vmul.f32 %v762, %v762
    %v795 = vmul.f32 %v763, %v763
    %v796 = vmul.f32 %v764, %v764
    %v797 = vmul.f32 %v765, %v765
    %v798 = vmul.f32 %v766, %v766
    %v799 = vmul.f32 %v767, %v767
    %v800 = vmul.f32 %v768, %v768
    %v801 = vmul.f32 %v769, %v769
    %v802 = vmul.f32 %v770, %v770
    %v803 = vmul.f32 %v771, %v771
    %v804 = vmul.f32 %v772, %v772
    %v805 = vmul.f32 %v773, %v773
    %v806 = vmul.f32 %v774, %v774
    %v807 = vmul.f32 %v775, %v775
    %v808 = vmul.f32 %v776, %v776
    %v809 = vmul.f32 %v777, %v777
    %v810 = vmul.f32 %v778, %v778
    %v811 = vmul.f32 %v779, %v779
    %v812 = vmul.f32 %v780, %v780
    %v813 = vmul.f32 %v781, %v781
    %v814 = vmul.f32 %v782, %v782
    %v815 = vmul.f32 %v783, %v783
    %v816 = vmul.f32 %v784, %v784
    %v817 = vmul.f32 %v785, %v785
    %v818 = vmul.f32 %v786, %v786
    %v819 = vadd.f32 %v787, %v788
    %v820 = vadd.f32 %v819, %v789
    %v821 = vadd.f32 %v820, %v790
    %v822 = vadd.f32 %v821, %v791
    %v823 = vadd.f32 %v822, %v792
    %v824 = vadd.f32 %v823, %v793
    %v825 = vadd.f32 %v824, %v794
    %v826 = vadd.f32 %v825, %v795
    %v827 = vadd.f32 %v826, %v796
    %v828 = vadd.f32 %v827, %v797
    %v829 = vadd.f32 %v828, %v798
    %v830 = vadd.f32 %v829, %v799
    %v831 = vadd.f32 %v830, %v800
    %v832 = vadd.f32 %v831, %v801
    %v833 = vadd.f32 %v832, %v802
    %v834 = vadd.f32 %v833, %v803
    %v835 = vadd.f32 %v834, %v804
    %v836 = vadd.f32 %v835, %v805
    %v837 = vadd.f32 %v836, %v806
    %v838 = vadd.f32 %v837, %v807
    %v839 = vadd.f32 %v838, %v808
    %v840 = vadd.f32 %v839, %v809
    %v841 = vadd.f32 %v840, %v810
    %v842 = vadd.f32 %v841, %v811
    %v843 = vadd.f32 %v842, %v812
    %v844 = vadd.f32 %v843, %v813
    %v845 = vadd.f32 %v844, %v814
    %v846 = vadd.f32 %v845, %v815
    %v847 = vadd.f32 %v846, %v816
    %v848 = vadd.f32 %v847, %v817
    %v849 = vadd.f32 %v848, %v818
    %v850 = vrot.slane %v849, 4
    %v851 = vadd.f32 %v849, %v850
    %v852 = vrot.slane %v851, 2
    %v853 = vadd.f32 %v851, %v852
    %v854 = vrot.slane %v853, 1
    %v855 = vadd.f32 %v853, %v854
    %v856 = vmul.f32 %v855, %v322
    %v857 = vadd.f32 %v856, 1e-05
    %v858 = vrsqrt.pop %v857
    %v859 = vmul.f32 %v858, %v857
    %v860 = vmul.f32 %v859, %v858
    %v861 = vmul.f32 0.5, %v860
    %v862 = vsub.f32 1.5, %v861
    %v863 = vmul.f32 %v858, %v862
    %vm864 = vweird.f32 %v857
    %vm865 = vweird.f32 %v858
    %vm866 = vmor %vm864, %vm865
    %v867 = vsel %vm866, %v858, %v863
    %v868 = vmul.f32 %v559, %v867
    %v869 = vmul.f32 %v754, %v868
    %v870 = vsub.f32 %v560, %v869
    %v872 = vperm.slane %v868, 0
    %v874 = vmul.f32 %v638, %v872
    %v875 = vmul.f32 %v640, %v872
    %v876 = vmul.f32 %v643, %v872
    %v877 = vmul.f32 %v645, %v872
    %v878 = vmul.f32 %v648, %v872
    %v879 = vmul.f32 %v650, %v872
    %v880 = vmul.f32 %v653, %v872
    %v881 = vmul.f32 %v655, %v872
    %v882 = vmul.f32 %v658, %v872
    %v883 = vmul.f32 %v660, %v872
    %v884 = vmul.f32 %v663, %v872
    %v885 = vmul.f32 %v665, %v872
    %v886 = vmul.f32 %v668, %v872
    %v887 = vmul.f32 %v670, %v872
    %v888 = vmul.f32 %v673, %v872
    %v889 = vmul.f32 %v675, %v872
    %v890 = vmul.f32 %v678, %v872
    %v891 = vmul.f32 %v680, %v872
    %v892 = vmul.f32 %v683, %v872
    %v893 = vmul.f32 %v685, %v872
    %v894 = vmul.f32 %v688, %v872
    %v895 = vmul.f32 %v690, %v872
    %v896 = vmul.f32 %v693, %v872
    %v897 = vmul.f32 %v695, %v872
    %v898 = vmul.f32 %v698, %v872
    %v899 = vmul.f32 %v700, %v872
    %v900 = vmul.f32 %v703, %v872
    %v901 = vmul.f32 %v705, %v872
    %v902 = vmul.f32 %v708, %v872
    %v903 = vmul.f32 %v710, %v872
    %v904 = vmul.f32 %v713, %v872
    %v905 = vmul.f32 %v715, %v872
    %v907 = vperm.slane %v870, 0
    %v909 = vadd.f32 %v874, %v907
    %v910 = vadd.f32 %v875, %v907
    %v911 = vadd.f32 %v876, %v907
    %v912 = vadd.f32 %v877, %v907
    %v913 = vadd.f32 %v878, %v907
    %v914 = vadd.f32 %v879, %v907
    %v915 = vadd.f32 %v880, %v907
    %v916 = vadd.f32 %v881, %v907
    %v917 = vadd.f32 %v882, %v907
    %v918 = vadd.f32 %v883, %v907
    %v919 = vadd.f32 %v884, %v907
    %v920 = vadd.f32 %v885, %v907
    %v921 = vadd.f32 %v886, %v907
    %v922 = vadd.f32 %v887, %v907
    %v923 = vadd.f32 %v888, %v907
    %v924 = vadd.f32 %v889, %v907
    %v925 = vadd.f32 %v890, %v907
    %v926 = vadd.f32 %v891, %v907
    %v927 = vadd.f32 %v892, %v907
    %v928 = vadd.f32 %v893, %v907
    %v929 = vadd.f32 %v894, %v907
    %v930 = vadd.f32 %v895, %v907
    %v931 = vadd.f32 %v896, %v907
    %v932 = vadd.f32 %v897, %v907
    %v933 = vadd.f32 %v898, %v907
    %v934 = vadd.f32 %v899, %v907
    %v935 = vadd.f32 %v900, %v907
    %v936 = vadd.f32 %v901, %v907
    %v937 = vadd.f32 %v902, %v907
    %v938 = vadd.f32 %v903, %v907
    %v939 = vadd.f32 %v904, %v907
    %v940 = vadd.f32 %v905, %v907
    %v941 = vmax.f32 %v909, 0.0
    %v942 = vmax.f32 %v910, 0.0
    %v943 = vmax.f32 %v911, 0.0
    %v944 = vmax.f32 %v912, 0.0
    %v945 = vmax.f32 %v913, 0.0
    %v946 = vmax.f32 %v914, 0.0
    %v947 = vmax.f32 %v915, 0.0
    %v948 = vmax.f32 %v916, 0.0
    %v949 = vmax.f32 %v917, 0.0
    %v950 = vmax.f32 %v918, 0.0
    %v951 = vmax.f32 %v919, 0.0
    %v952 = vmax.f32 %v920, 0.0
    %v953 = vmax.f32 %v921, 0.0
    %v954 = vmax.f32 %v922, 0.0
    %v955 = vmax.f32 %v923, 0.0
    %v956 = vmax.f32 %v924, 0.0
    %v957 = vmax.f32 %v925, 0.0
    %v958 = vmax.f32 %v926, 0.0
    %v959 = vmax.f32 %v927, 0.0
    %v960 = vmax.f32 %v928, 0.0
    %v961 = vmax.f32 %v929, 0.0
    %v962 = vmax.f32 %v930, 0.0
    %v963 = vmax.f32 %v931, 0.0
    %v964 = vmax.f32 %v932, 0.0
    %v965 = vmax.f32 %v933, 0.0
    %v966 = vmax.f32 %v934, 0.0
    %v967 = vmax.f32 %v935, 0.0
    %v968 = vmax.f32 %v936, 0.0
    %v969 = vmax.f32 %v937, 0.0
    %v970 = vmax.f32 %v938, 0.0
    %v971 = vmax.f32 %v939, 0.0
    %v972 = vmax.f32 %v940, 0.0
    %v973 = vpack.c.bf16 %v942, %v941
    %v974 = vpack.c.bf16 %v944, %v943
    %v975 = vpack.c.bf16 %v946, %v945
    %v976 = vpack.c.bf16 %v948, %v947
    %v977 = vpack.c.bf16 %v950, %v949
    %v978 = vpack.c.bf16 %v952, %v951
    %v979 = vpack.c.bf16 %v954, %v953
    %v980 = vpack.c.bf16 %v956, %v955
    %v981 = vpack.c.bf16 %v958, %v957
    %v982 = vpack.c.bf16 %v960, %v959
    %v983 = vpack.c.bf16 %v962, %v961
    %v984 = vpack.c.bf16 %v964, %v963
    %v985 = vpack.c.bf16 %v966, %v965
    %v986 = vpack.c.bf16 %v968, %v967
    %v987 = vpack.c.bf16 %v970, %v969
    %v988 = vpack.c.bf16 %v972, %v971
    %v989 = vld [vmem:[%s10] sm:$0x1]
    %v990 = vld [vmem:[%s11] sm:$0x1]
    %v991 = vld [vmem:[%s12] sm:$0x1]
    %v992 = vld [vmem:[%s9] sm:$0xf]
    %v993 = vld [vmem:[%s9 + $0x4] sm:$0xf]
    %v994 = vld [vmem:[%s9 + $0x8] sm:$0xf]
    %v995 = vld [vmem:[%s9 + $0xc] sm:$0xf]
    %v996 = vld [vmem:[%s9 + $0x10] sm:$0xf]
    %v997 = vld [vmem:[%s9 + $0x14] sm:$0xf]
    %v998 = vld [vmem:[%s9 + $0x18] sm:$0xf]
    %v999 = vld [vmem:[%s9 + $0x1c] sm:$0xf]
    %v1000 = vld [vmem:[%s9 + $0x20] sm:$0xf]
    %v1001 = vld [vmem:[%s9 + $0x24] sm:$0xf]
    %v1002 = vld [vmem:[%s9 + $0x28] sm:$0xf]
    %v1003 = vld [vmem:[%s9 + $0x2c] sm:$0xf]
    %v1004 = vld [vmem:[%s9 + $0x30] sm:$0xf]
    %v1005 = vld [vmem:[%s9 + $0x34] sm:$0xf]
    %v1006 = vld [vmem:[%s9 + $0x38] sm:$0xf]
    %v1007 = vld [vmem:[%s9 + $0x3c] sm:$0xf]
    %v1009 = vperm.slane %v989, 0
    %v1027 = vunpack.c.l.b16 %v992
    %v1028 = vunpack.c.l.b16 %v993
    %v1029 = vunpack.c.l.b16 %v994
    %v1030 = vunpack.c.l.b16 %v995
    %v1031 = vunpack.c.l.b16 %v996
    %v1032 = vunpack.c.l.b16 %v997
    %v1033 = vunpack.c.l.b16 %v998
    %v1034 = vunpack.c.l.b16 %v999
    %v1035 = vunpack.c.l.b16 %v1000
    %v1036 = vunpack.c.l.b16 %v1001
    %v1037 = vunpack.c.l.b16 %v1002
    %v1038 = vunpack.c.l.b16 %v1003
    %v1039 = vunpack.c.l.b16 %v1004
    %v1040 = vunpack.c.l.b16 %v1005
    %v1041 = vunpack.c.l.b16 %v1006
    %v1042 = vunpack.c.l.b16 %v1007
    %v1043 = vpack.c.b16 %v1028, %v1027
    %v1044 = vpack.c.b16 %v1030, %v1029
    %v1045 = vpack.c.b16 %v1032, %v1031
    %v1046 = vpack.c.b16 %v1034, %v1033
    %v1047 = vpack.c.b16 %v1036, %v1035
    %v1048 = vpack.c.b16 %v1038, %v1037
    %v1049 = vpack.c.b16 %v1040, %v1039
    %v1050 = vpack.c.b16 %v1042, %v1041
    %1059 = vmatpush.bf16.msra.mxu0 %v1050
    %1060 = vmatpush.bf16.msra.mxu0 %v1049
    %1061 = vmatpush.bf16.msra.mxu0 %v1048
    %1062 = vmatpush.bf16.msra.mxu0 %v1047
    %1063 = vmatpush.bf16.msra.mxu0 %v1046
    %1064 = vmatpush.bf16.msra.mxu0 %v1045
    %1065 = vmatpush.bf16.msra.mxu0 %v1044
    %1066 = vmatpush.bf16.msra.mxu0 %v1043
    %1067 = vmatmul.bf16.gmra.mxu0 %v973
    %v1068 = vpop.f32.mrf.mxu0
    %v1069 = vadd.f32 %v1009, %v1068
    %v1070 = vpop.f32.mrf.mxu0
    %v1071 = vadd.f32 %v1009, %v1070
    %1072 = vmatmul.bf16.gmra.mxu0 %v974
    %v1073 = vpop.f32.mrf.mxu0
    %v1074 = vadd.f32 %v1009, %v1073
    %v1075 = vpop.f32.mrf.mxu0
    %v1076 = vadd.f32 %v1009, %v1075
    %1077 = vmatmul.bf16.gmra.mxu0 %v975
    %v1078 = vpop.f32.mrf.mxu0
    %v1079 = vadd.f32 %v1009, %v1078
    %v1080 = vpop.f32.mrf.mxu0
    %v1081 = vadd.f32 %v1009, %v1080
    %1082 = vmatmul.bf16.gmra.mxu0 %v976
    %v1083 = vpop.f32.mrf.mxu0
    %v1084 = vadd.f32 %v1009, %v1083
    %v1085 = vpop.f32.mrf.mxu0
    %v1086 = vadd.f32 %v1009, %v1085
    %1087 = vmatmul.bf16.gmra.mxu0 %v977
    %v1088 = vpop.f32.mrf.mxu0
    %v1089 = vadd.f32 %v1009, %v1088
    %v1090 = vpop.f32.mrf.mxu0
    %v1091 = vadd.f32 %v1009, %v1090
    %1092 = vmatmul.bf16.gmra.mxu0 %v978
    %v1093 = vpop.f32.mrf.mxu0
    %v1094 = vadd.f32 %v1009, %v1093
    %v1095 = vpop.f32.mrf.mxu0
    %v1096 = vadd.f32 %v1009, %v1095
    %1097 = vmatmul.bf16.gmra.mxu0 %v979
    %v1098 = vpop.f32.mrf.mxu0
    %v1099 = vadd.f32 %v1009, %v1098
    %v1100 = vpop.f32.mrf.mxu0
    %v1101 = vadd.f32 %v1009, %v1100
    %1102 = vmatmul.bf16.gmra.mxu0 %v980
    %v1103 = vpop.f32.mrf.mxu0
    %v1104 = vadd.f32 %v1009, %v1103
    %v1105 = vpop.f32.mrf.mxu0
    %v1106 = vadd.f32 %v1009, %v1105
    %1107 = vmatmul.bf16.gmra.mxu0 %v981
    %v1108 = vpop.f32.mrf.mxu0
    %v1109 = vadd.f32 %v1009, %v1108
    %v1110 = vpop.f32.mrf.mxu0
    %v1111 = vadd.f32 %v1009, %v1110
    %1112 = vmatmul.bf16.gmra.mxu0 %v982
    %v1113 = vpop.f32.mrf.mxu0
    %v1114 = vadd.f32 %v1009, %v1113
    %v1115 = vpop.f32.mrf.mxu0
    %v1116 = vadd.f32 %v1009, %v1115
    %1117 = vmatmul.bf16.gmra.mxu0 %v983
    %v1118 = vpop.f32.mrf.mxu0
    %v1119 = vadd.f32 %v1009, %v1118
    %v1120 = vpop.f32.mrf.mxu0
    %v1121 = vadd.f32 %v1009, %v1120
    %1122 = vmatmul.bf16.gmra.mxu0 %v984
    %v1123 = vpop.f32.mrf.mxu0
    %v1124 = vadd.f32 %v1009, %v1123
    %v1125 = vpop.f32.mrf.mxu0
    %v1126 = vadd.f32 %v1009, %v1125
    %1127 = vmatmul.bf16.gmra.mxu0 %v985
    %v1128 = vpop.f32.mrf.mxu0
    %v1129 = vadd.f32 %v1009, %v1128
    %v1130 = vpop.f32.mrf.mxu0
    %v1131 = vadd.f32 %v1009, %v1130
    %1132 = vmatmul.bf16.gmra.mxu0 %v986
    %v1133 = vpop.f32.mrf.mxu0
    %v1134 = vadd.f32 %v1009, %v1133
    %v1135 = vpop.f32.mrf.mxu0
    %v1136 = vadd.f32 %v1009, %v1135
    %1137 = vmatmul.bf16.gmra.mxu0 %v987
    %v1138 = vpop.f32.mrf.mxu0
    %v1139 = vadd.f32 %v1009, %v1138
    %v1140 = vpop.f32.mrf.mxu0
    %v1141 = vadd.f32 %v1009, %v1140
    %1142 = vmatmul.bf16.gmra.mxu0 %v988
    %v1143 = vpop.f32.mrf.mxu0
    %v1144 = vadd.f32 %v1009, %v1143
    %v1145 = vpop.f32.mrf.mxu0
    %v1146 = vadd.f32 %v1009, %v1145
    %1147 = vdwg.mxu0
    %v1148 = vadd.f32 %v1069, %v1071
    %v1149 = vadd.f32 %v1148, %v1074
    %v1150 = vadd.f32 %v1149, %v1076
    %v1151 = vadd.f32 %v1150, %v1079
    %v1152 = vadd.f32 %v1151, %v1081
    %v1153 = vadd.f32 %v1152, %v1084
    %v1154 = vadd.f32 %v1153, %v1086
    %v1155 = vadd.f32 %v1154, %v1089
    %v1156 = vadd.f32 %v1155, %v1091
    %v1157 = vadd.f32 %v1156, %v1094
    %v1158 = vadd.f32 %v1157, %v1096
    %v1159 = vadd.f32 %v1158, %v1099
    %v1160 = vadd.f32 %v1159, %v1101
    %v1161 = vadd.f32 %v1160, %v1104
    %v1162 = vadd.f32 %v1161, %v1106
    %v1163 = vadd.f32 %v1162, %v1109
    %v1164 = vadd.f32 %v1163, %v1111
    %v1165 = vadd.f32 %v1164, %v1114
    %v1166 = vadd.f32 %v1165, %v1116
    %v1167 = vadd.f32 %v1166, %v1119
    %v1168 = vadd.f32 %v1167, %v1121
    %v1169 = vadd.f32 %v1168, %v1124
    %v1170 = vadd.f32 %v1169, %v1126
    %v1171 = vadd.f32 %v1170, %v1129
    %v1172 = vadd.f32 %v1171, %v1131
    %v1173 = vadd.f32 %v1172, %v1134
    %v1174 = vadd.f32 %v1173, %v1136
    %v1175 = vadd.f32 %v1174, %v1139
    %v1176 = vadd.f32 %v1175, %v1141
    %v1177 = vadd.f32 %v1176, %v1144
    %v1178 = vadd.f32 %v1177, %v1146
    %v1179 = vrot.slane %v1178, 4
    %v1180 = vadd.f32 %v1178, %v1179
    %v1181 = vrot.slane %v1180, 2
    %v1182 = vadd.f32 %v1180, %v1181
    %v1183 = vrot.slane %v1182, 1
    %v1184 = vadd.f32 %v1182, %v1183
    %v1185 = vmul.f32 %v1184, %v322
    %v1186 = vsub.f32 %v1069, %v1185
    %v1187 = vsub.f32 %v1071, %v1185
    %v1188 = vsub.f32 %v1074, %v1185
    %v1189 = vsub.f32 %v1076, %v1185
    %v1190 = vsub.f32 %v1079, %v1185
    %v1191 = vsub.f32 %v1081, %v1185
    %v1192 = vsub.f32 %v1084, %v1185
    %v1193 = vsub.f32 %v1086, %v1185
    %v1194 = vsub.f32 %v1089, %v1185
    %v1195 = vsub.f32 %v1091, %v1185
    %v1196 = vsub.f32 %v1094, %v1185
    %v1197 = vsub.f32 %v1096, %v1185
    %v1198 = vsub.f32 %v1099, %v1185
    %v1199 = vsub.f32 %v1101, %v1185
    %v1200 = vsub.f32 %v1104, %v1185
    %v1201 = vsub.f32 %v1106, %v1185
    %v1202 = vsub.f32 %v1109, %v1185
    %v1203 = vsub.f32 %v1111, %v1185
    %v1204 = vsub.f32 %v1114, %v1185
    %v1205 = vsub.f32 %v1116, %v1185
    %v1206 = vsub.f32 %v1119, %v1185
    %v1207 = vsub.f32 %v1121, %v1185
    %v1208 = vsub.f32 %v1124, %v1185
    %v1209 = vsub.f32 %v1126, %v1185
    %v1210 = vsub.f32 %v1129, %v1185
    %v1211 = vsub.f32 %v1131, %v1185
    %v1212 = vsub.f32 %v1134, %v1185
    %v1213 = vsub.f32 %v1136, %v1185
    %v1214 = vsub.f32 %v1139, %v1185
    %v1215 = vsub.f32 %v1141, %v1185
    %v1216 = vsub.f32 %v1144, %v1185
    %v1217 = vsub.f32 %v1146, %v1185
    %v1218 = vmul.f32 %v1186, %v1186
    %v1219 = vmul.f32 %v1187, %v1187
    %v1220 = vmul.f32 %v1188, %v1188
    %v1221 = vmul.f32 %v1189, %v1189
    %v1222 = vmul.f32 %v1190, %v1190
    %v1223 = vmul.f32 %v1191, %v1191
    %v1224 = vmul.f32 %v1192, %v1192
    %v1225 = vmul.f32 %v1193, %v1193
    %v1226 = vmul.f32 %v1194, %v1194
    %v1227 = vmul.f32 %v1195, %v1195
    %v1228 = vmul.f32 %v1196, %v1196
    %v1229 = vmul.f32 %v1197, %v1197
    %v1230 = vmul.f32 %v1198, %v1198
    %v1231 = vmul.f32 %v1199, %v1199
    %v1232 = vmul.f32 %v1200, %v1200
    %v1233 = vmul.f32 %v1201, %v1201
    %v1234 = vmul.f32 %v1202, %v1202
    %v1235 = vmul.f32 %v1203, %v1203
    %v1236 = vmul.f32 %v1204, %v1204
    %v1237 = vmul.f32 %v1205, %v1205
    %v1238 = vmul.f32 %v1206, %v1206
    %v1239 = vmul.f32 %v1207, %v1207
    %v1240 = vmul.f32 %v1208, %v1208
    %v1241 = vmul.f32 %v1209, %v1209
    %v1242 = vmul.f32 %v1210, %v1210
    %v1243 = vmul.f32 %v1211, %v1211
    %v1244 = vmul.f32 %v1212, %v1212
    %v1245 = vmul.f32 %v1213, %v1213
    %v1246 = vmul.f32 %v1214, %v1214
    %v1247 = vmul.f32 %v1215, %v1215
    %v1248 = vmul.f32 %v1216, %v1216
    %v1249 = vmul.f32 %v1217, %v1217
    %v1250 = vadd.f32 %v1218, %v1219
    %v1251 = vadd.f32 %v1250, %v1220
    %v1252 = vadd.f32 %v1251, %v1221
    %v1253 = vadd.f32 %v1252, %v1222
    %v1254 = vadd.f32 %v1253, %v1223
    %v1255 = vadd.f32 %v1254, %v1224
    %v1256 = vadd.f32 %v1255, %v1225
    %v1257 = vadd.f32 %v1256, %v1226
    %v1258 = vadd.f32 %v1257, %v1227
    %v1259 = vadd.f32 %v1258, %v1228
    %v1260 = vadd.f32 %v1259, %v1229
    %v1261 = vadd.f32 %v1260, %v1230
    %v1262 = vadd.f32 %v1261, %v1231
    %v1263 = vadd.f32 %v1262, %v1232
    %v1264 = vadd.f32 %v1263, %v1233
    %v1265 = vadd.f32 %v1264, %v1234
    %v1266 = vadd.f32 %v1265, %v1235
    %v1267 = vadd.f32 %v1266, %v1236
    %v1268 = vadd.f32 %v1267, %v1237
    %v1269 = vadd.f32 %v1268, %v1238
    %v1270 = vadd.f32 %v1269, %v1239
    %v1271 = vadd.f32 %v1270, %v1240
    %v1272 = vadd.f32 %v1271, %v1241
    %v1273 = vadd.f32 %v1272, %v1242
    %v1274 = vadd.f32 %v1273, %v1243
    %v1275 = vadd.f32 %v1274, %v1244
    %v1276 = vadd.f32 %v1275, %v1245
    %v1277 = vadd.f32 %v1276, %v1246
    %v1278 = vadd.f32 %v1277, %v1247
    %v1279 = vadd.f32 %v1278, %v1248
    %v1280 = vadd.f32 %v1279, %v1249
    %v1281 = vrot.slane %v1280, 4
    %v1282 = vadd.f32 %v1280, %v1281
    %v1283 = vrot.slane %v1282, 2
    %v1284 = vadd.f32 %v1282, %v1283
    %v1285 = vrot.slane %v1284, 1
    %v1286 = vadd.f32 %v1284, %v1285
    %v1287 = vmul.f32 %v1286, %v322
    %v1288 = vadd.f32 %v1287, 1e-05
    %v1289 = vrsqrt.pop %v1288
    %v1290 = vmul.f32 %v1289, %v1288
    %v1291 = vmul.f32 %v1290, %v1289
    %v1292 = vmul.f32 0.5, %v1291
    %v1293 = vsub.f32 1.5, %v1292
    %v1294 = vmul.f32 %v1289, %v1293
    %vm1295 = vweird.f32 %v1288
    %vm1296 = vweird.f32 %v1289
    %vm1297 = vmor %vm1295, %vm1296
    %v1298 = vsel %vm1297, %v1289, %v1294
    %v1299 = vmul.f32 %v990, %v1298
    %v1300 = vmul.f32 %v1185, %v1299
    %v1301 = vsub.f32 %v991, %v1300
    %v1303 = vperm.slane %v1299, 0
    %v1305 = vmul.f32 %v1069, %v1303
    %v1306 = vmul.f32 %v1071, %v1303
    %v1307 = vmul.f32 %v1074, %v1303
    %v1308 = vmul.f32 %v1076, %v1303
    %v1309 = vmul.f32 %v1079, %v1303
    %v1310 = vmul.f32 %v1081, %v1303
    %v1311 = vmul.f32 %v1084, %v1303
    %v1312 = vmul.f32 %v1086, %v1303
    %v1313 = vmul.f32 %v1089, %v1303
    %v1314 = vmul.f32 %v1091, %v1303
    %v1315 = vmul.f32 %v1094, %v1303
    %v1316 = vmul.f32 %v1096, %v1303
    %v1317 = vmul.f32 %v1099, %v1303
    %v1318 = vmul.f32 %v1101, %v1303
    %v1319 = vmul.f32 %v1104, %v1303
    %v1320 = vmul.f32 %v1106, %v1303
    %v1321 = vmul.f32 %v1109, %v1303
    %v1322 = vmul.f32 %v1111, %v1303
    %v1323 = vmul.f32 %v1114, %v1303
    %v1324 = vmul.f32 %v1116, %v1303
    %v1325 = vmul.f32 %v1119, %v1303
    %v1326 = vmul.f32 %v1121, %v1303
    %v1327 = vmul.f32 %v1124, %v1303
    %v1328 = vmul.f32 %v1126, %v1303
    %v1329 = vmul.f32 %v1129, %v1303
    %v1330 = vmul.f32 %v1131, %v1303
    %v1331 = vmul.f32 %v1134, %v1303
    %v1332 = vmul.f32 %v1136, %v1303
    %v1333 = vmul.f32 %v1139, %v1303
    %v1334 = vmul.f32 %v1141, %v1303
    %v1335 = vmul.f32 %v1144, %v1303
    %v1336 = vmul.f32 %v1146, %v1303
    %v1338 = vperm.slane %v1301, 0
    %v1340 = vadd.f32 %v1305, %v1338
    %v1341 = vadd.f32 %v1306, %v1338
    %v1342 = vadd.f32 %v1307, %v1338
    %v1343 = vadd.f32 %v1308, %v1338
    %v1344 = vadd.f32 %v1309, %v1338
    %v1345 = vadd.f32 %v1310, %v1338
    %v1346 = vadd.f32 %v1311, %v1338
    %v1347 = vadd.f32 %v1312, %v1338
    %v1348 = vadd.f32 %v1313, %v1338
    %v1349 = vadd.f32 %v1314, %v1338
    %v1350 = vadd.f32 %v1315, %v1338
    %v1351 = vadd.f32 %v1316, %v1338
    %v1352 = vadd.f32 %v1317, %v1338
    %v1353 = vadd.f32 %v1318, %v1338
    %v1354 = vadd.f32 %v1319, %v1338
    %v1355 = vadd.f32 %v1320, %v1338
    %v1356 = vadd.f32 %v1321, %v1338
    %v1357 = vadd.f32 %v1322, %v1338
    %v1358 = vadd.f32 %v1323, %v1338
    %v1359 = vadd.f32 %v1324, %v1338
    %v1360 = vadd.f32 %v1325, %v1338
    %v1361 = vadd.f32 %v1326, %v1338
    %v1362 = vadd.f32 %v1327, %v1338
    %v1363 = vadd.f32 %v1328, %v1338
    %v1364 = vadd.f32 %v1329, %v1338
    %v1365 = vadd.f32 %v1330, %v1338
    %v1366 = vadd.f32 %v1331, %v1338
    %v1367 = vadd.f32 %v1332, %v1338
    %v1368 = vadd.f32 %v1333, %v1338
    %v1369 = vadd.f32 %v1334, %v1338
    %v1370 = vadd.f32 %v1335, %v1338
    %v1371 = vadd.f32 %v1336, %v1338
    %v1372 = vld [vmem:[%s14] sm:$0x1]
    %v1373 = vld [vmem:[%s15] sm:$0x1]
    %v1374 = vld [vmem:[%s13] sm:$0xf]
    %v1375 = vld [vmem:[%s13 + $0x4] sm:$0xf]
    %v1376 = vld [vmem:[%s13 + $0x8] sm:$0xf]
    %v1377 = vld [vmem:[%s13 + $0xc] sm:$0xf]
    %v1378 = vld [vmem:[%s13 + $0x10] sm:$0xf]
    %v1379 = vld [vmem:[%s13 + $0x14] sm:$0xf]
    %v1380 = vld [vmem:[%s13 + $0x18] sm:$0xf]
    %v1381 = vld [vmem:[%s13 + $0x1c] sm:$0xf]
    %v1390 = vunpack.c.l.b16 %v1374
    %v1391 = vunpack.c.l.b16 %v1375
    %v1392 = vunpack.c.l.b16 %v1376
    %v1393 = vunpack.c.l.b16 %v1377
    %v1394 = vunpack.c.l.b16 %v1378
    %v1395 = vunpack.c.l.b16 %v1379
    %v1396 = vunpack.c.l.b16 %v1380
    %v1397 = vunpack.c.l.b16 %v1381
    %v1398 = vpack.c.b16 %v1391, %v1390
    %v1399 = vpack.c.b16 %v1393, %v1392
    %v1400 = vpack.c.b16 %v1395, %v1394
    %v1401 = vpack.c.b16 %v1397, %v1396
    %1406 = vmatpush.bf16.msra.mxu0 0
    %1407 = vmatpush.bf16.msra.mxu0 0
    %1408 = vmatpush.bf16.msra.mxu0 0
    %1409 = vmatpush.bf16.msra.mxu0 0
    %1410 = vmatpush.bf16.msra.mxu0 %v1401
    %1411 = vmatpush.bf16.msra.mxu0 %v1400
    %1412 = vmatpush.bf16.msra.mxu0 %v1399
    %1413 = vmatpush.bf16.msra.mxu0 %v1398
    %1414 = vmatmul.bf16.gmra.mxu0 %v143
    %v1415 = vpop.f32.mrf.mxu0
    %v1416 = vadd.f32 0.0, %v1415
    %v1417 = vpop.f32.mrf.mxu0
    %v1418 = vadd.f32 0.0, %v1417
    %1419 = vmatmul.bf16.gmra.mxu0 %v146
    %v1420 = vpop.f32.mrf.mxu0
    %v1421 = vadd.f32 0.0, %v1420
    %v1422 = vpop.f32.mrf.mxu0
    %v1423 = vadd.f32 0.0, %v1422
    %1424 = vmatmul.bf16.gmra.mxu0 %v149
    %v1425 = vpop.f32.mrf.mxu0
    %v1426 = vadd.f32 0.0, %v1425
    %v1427 = vpop.f32.mrf.mxu0
    %v1428 = vadd.f32 0.0, %v1427
    %1429 = vmatmul.bf16.gmra.mxu0 %v152
    %v1430 = vpop.f32.mrf.mxu0
    %v1431 = vadd.f32 0.0, %v1430
    %v1432 = vpop.f32.mrf.mxu0
    %v1433 = vadd.f32 0.0, %v1432
    %1434 = vmatmul.bf16.gmra.mxu0 %v155
    %v1435 = vpop.f32.mrf.mxu0
    %v1436 = vadd.f32 0.0, %v1435
    %v1437 = vpop.f32.mrf.mxu0
    %v1438 = vadd.f32 0.0, %v1437
    %1439 = vmatmul.bf16.gmra.mxu0 %v158
    %v1440 = vpop.f32.mrf.mxu0
    %v1441 = vadd.f32 0.0, %v1440
    %v1442 = vpop.f32.mrf.mxu0
    %v1443 = vadd.f32 0.0, %v1442
    %1444 = vmatmul.bf16.gmra.mxu0 %v161
    %v1445 = vpop.f32.mrf.mxu0
    %v1446 = vadd.f32 0.0, %v1445
    %v1447 = vpop.f32.mrf.mxu0
    %v1448 = vadd.f32 0.0, %v1447
    %1449 = vmatmul.bf16.gmra.mxu0 %v164
    %v1450 = vpop.f32.mrf.mxu0
    %v1451 = vadd.f32 0.0, %v1450
    %v1452 = vpop.f32.mrf.mxu0
    %v1453 = vadd.f32 0.0, %v1452
    %1454 = vmatmul.bf16.gmra.mxu0 %v167
    %v1455 = vpop.f32.mrf.mxu0
    %v1456 = vadd.f32 0.0, %v1455
    %v1457 = vpop.f32.mrf.mxu0
    %v1458 = vadd.f32 0.0, %v1457
    %1459 = vmatmul.bf16.gmra.mxu0 %v170
    %v1460 = vpop.f32.mrf.mxu0
    %v1461 = vadd.f32 0.0, %v1460
    %v1462 = vpop.f32.mrf.mxu0
    %v1463 = vadd.f32 0.0, %v1462
    %1464 = vmatmul.bf16.gmra.mxu0 %v173
    %v1465 = vpop.f32.mrf.mxu0
    %v1466 = vadd.f32 0.0, %v1465
    %v1467 = vpop.f32.mrf.mxu0
    %v1468 = vadd.f32 0.0, %v1467
    %1469 = vmatmul.bf16.gmra.mxu0 %v176
    %v1470 = vpop.f32.mrf.mxu0
    %v1471 = vadd.f32 0.0, %v1470
    %v1472 = vpop.f32.mrf.mxu0
    %v1473 = vadd.f32 0.0, %v1472
    %1474 = vmatmul.bf16.gmra.mxu0 %v179
    %v1475 = vpop.f32.mrf.mxu0
    %v1476 = vadd.f32 0.0, %v1475
    %v1477 = vpop.f32.mrf.mxu0
    %v1478 = vadd.f32 0.0, %v1477
    %1479 = vmatmul.bf16.gmra.mxu0 %v182
    %v1480 = vpop.f32.mrf.mxu0
    %v1481 = vadd.f32 0.0, %v1480
    %v1482 = vpop.f32.mrf.mxu0
    %v1483 = vadd.f32 0.0, %v1482
    %1484 = vmatmul.bf16.gmra.mxu0 %v185
    %v1485 = vpop.f32.mrf.mxu0
    %v1486 = vadd.f32 0.0, %v1485
    %v1487 = vpop.f32.mrf.mxu0
    %v1488 = vadd.f32 0.0, %v1487
    %1489 = vmatmul.bf16.gmra.mxu0 %v188
    %v1490 = vpop.f32.mrf.mxu0
    %v1491 = vadd.f32 0.0, %v1490
    %v1492 = vpop.f32.mrf.mxu0
    %v1493 = vadd.f32 0.0, %v1492
    %1494 = vdwg.mxu0
    %v1495 = vadd.f32 %v1416, %v1418
    %v1496 = vadd.f32 %v1495, %v1421
    %v1497 = vadd.f32 %v1496, %v1423
    %v1498 = vadd.f32 %v1497, %v1426
    %v1499 = vadd.f32 %v1498, %v1428
    %v1500 = vadd.f32 %v1499, %v1431
    %v1501 = vadd.f32 %v1500, %v1433
    %v1502 = vadd.f32 %v1501, %v1436
    %v1503 = vadd.f32 %v1502, %v1438
    %v1504 = vadd.f32 %v1503, %v1441
    %v1505 = vadd.f32 %v1504, %v1443
    %v1506 = vadd.f32 %v1505, %v1446
    %v1507 = vadd.f32 %v1506, %v1448
    %v1508 = vadd.f32 %v1507, %v1451
    %v1509 = vadd.f32 %v1508, %v1453
    %v1510 = vadd.f32 %v1509, %v1456
    %v1511 = vadd.f32 %v1510, %v1458
    %v1512 = vadd.f32 %v1511, %v1461
    %v1513 = vadd.f32 %v1512, %v1463
    %v1514 = vadd.f32 %v1513, %v1466
    %v1515 = vadd.f32 %v1514, %v1468
    %v1516 = vadd.f32 %v1515, %v1471
    %v1517 = vadd.f32 %v1516, %v1473
    %v1518 = vadd.f32 %v1517, %v1476
    %v1519 = vadd.f32 %v1518, %v1478
    %v1520 = vadd.f32 %v1519, %v1481
    %v1521 = vadd.f32 %v1520, %v1483
    %v1522 = vadd.f32 %v1521, %v1486
    %v1523 = vadd.f32 %v1522, %v1488
    %v1524 = vadd.f32 %v1523, %v1491
    %v1525 = vadd.f32 %v1524, %v1493
    %v1526 = vrot.slane %v1525, 4
    %v1527 = vadd.f32 %v1525, %v1526
    %v1528 = vrot.slane %v1527, 2
    %v1529 = vadd.f32 %v1527, %v1528
    %v1530 = vrot.slane %v1529, 1
    %v1531 = vadd.f32 %v1529, %v1530
    %v1532 = vmul.f32 %v1531, %v322
    %v1533 = vsub.f32 %v1416, %v1532
    %v1534 = vsub.f32 %v1418, %v1532
    %v1535 = vsub.f32 %v1421, %v1532
    %v1536 = vsub.f32 %v1423, %v1532
    %v1537 = vsub.f32 %v1426, %v1532
    %v1538 = vsub.f32 %v1428, %v1532
    %v1539 = vsub.f32 %v1431, %v1532
    %v1540 = vsub.f32 %v1433, %v1532
    %v1541 = vsub.f32 %v1436, %v1532
    %v1542 = vsub.f32 %v1438, %v1532
    %v1543 = vsub.f32 %v1441, %v1532
    %v1544 = vsub.f32 %v1443, %v1532
    %v1545 = vsub.f32 %v1446, %v1532
    %v1546 = vsub.f32 %v1448, %v1532
    %v1547 = vsub.f32 %v1451, %v1532
    %v1548 = vsub.f32 %v1453, %v1532
    %v1549 = vsub.f32 %v1456, %v1532
    %v1550 = vsub.f32 %v1458, %v1532
    %v1551 = vsub.f32 %v1461, %v1532
    %v1552 = vsub.f32 %v1463, %v1532
    %v1553 = vsub.f32 %v1466, %v1532
    %v1554 = vsub.f32 %v1468, %v1532
    %v1555 = vsub.f32 %v1471, %v1532
    %v1556 = vsub.f32 %v1473, %v1532
    %v1557 = vsub.f32 %v1476, %v1532
    %v1558 = vsub.f32 %v1478, %v1532
    %v1559 = vsub.f32 %v1481, %v1532
    %v1560 = vsub.f32 %v1483, %v1532
    %v1561 = vsub.f32 %v1486, %v1532
    %v1562 = vsub.f32 %v1488, %v1532
    %v1563 = vsub.f32 %v1491, %v1532
    %v1564 = vsub.f32 %v1493, %v1532
    %v1565 = vmul.f32 %v1533, %v1533
    %v1566 = vmul.f32 %v1534, %v1534
    %v1567 = vmul.f32 %v1535, %v1535
    %v1568 = vmul.f32 %v1536, %v1536
    %v1569 = vmul.f32 %v1537, %v1537
    %v1570 = vmul.f32 %v1538, %v1538
    %v1571 = vmul.f32 %v1539, %v1539
    %v1572 = vmul.f32 %v1540, %v1540
    %v1573 = vmul.f32 %v1541, %v1541
    %v1574 = vmul.f32 %v1542, %v1542
    %v1575 = vmul.f32 %v1543, %v1543
    %v1576 = vmul.f32 %v1544, %v1544
    %v1577 = vmul.f32 %v1545, %v1545
    %v1578 = vmul.f32 %v1546, %v1546
    %v1579 = vmul.f32 %v1547, %v1547
    %v1580 = vmul.f32 %v1548, %v1548
    %v1581 = vmul.f32 %v1549, %v1549
    %v1582 = vmul.f32 %v1550, %v1550
    %v1583 = vmul.f32 %v1551, %v1551
    %v1584 = vmul.f32 %v1552, %v1552
    %v1585 = vmul.f32 %v1553, %v1553
    %v1586 = vmul.f32 %v1554, %v1554
    %v1587 = vmul.f32 %v1555, %v1555
    %v1588 = vmul.f32 %v1556, %v1556
    %v1589 = vmul.f32 %v1557, %v1557
    %v1590 = vmul.f32 %v1558, %v1558
    %v1591 = vmul.f32 %v1559, %v1559
    %v1592 = vmul.f32 %v1560, %v1560
    %v1593 = vmul.f32 %v1561, %v1561
    %v1594 = vmul.f32 %v1562, %v1562
    %v1595 = vmul.f32 %v1563, %v1563
    %v1596 = vmul.f32 %v1564, %v1564
    %v1597 = vadd.f32 %v1565, %v1566
    %v1598 = vadd.f32 %v1597, %v1567
    %v1599 = vadd.f32 %v1598, %v1568
    %v1600 = vadd.f32 %v1599, %v1569
    %v1601 = vadd.f32 %v1600, %v1570
    %v1602 = vadd.f32 %v1601, %v1571
    %v1603 = vadd.f32 %v1602, %v1572
    %v1604 = vadd.f32 %v1603, %v1573
    %v1605 = vadd.f32 %v1604, %v1574
    %v1606 = vadd.f32 %v1605, %v1575
    %v1607 = vadd.f32 %v1606, %v1576
    %v1608 = vadd.f32 %v1607, %v1577
    %v1609 = vadd.f32 %v1608, %v1578
    %v1610 = vadd.f32 %v1609, %v1579
    %v1611 = vadd.f32 %v1610, %v1580
    %v1612 = vadd.f32 %v1611, %v1581
    %v1613 = vadd.f32 %v1612, %v1582
    %v1614 = vadd.f32 %v1613, %v1583
    %v1615 = vadd.f32 %v1614, %v1584
    %v1616 = vadd.f32 %v1615, %v1585
    %v1617 = vadd.f32 %v1616, %v1586
    %v1618 = vadd.f32 %v1617, %v1587
    %v1619 = vadd.f32 %v1618, %v1588
    %v1620 = vadd.f32 %v1619, %v1589
    %v1621 = vadd.f32 %v1620, %v1590
    %v1622 = vadd.f32 %v1621, %v1591
    %v1623 = vadd.f32 %v1622, %v1592
    %v1624 = vadd.f32 %v1623, %v1593
    %v1625 = vadd.f32 %v1624, %v1594
    %v1626 = vadd.f32 %v1625, %v1595
    %v1627 = vadd.f32 %v1626, %v1596
    %v1628 = vrot.slane %v1627, 4
    %v1629 = vadd.f32 %v1627, %v1628
    %v1630 = vrot.slane %v1629, 2
    %v1631 = vadd.f32 %v1629, %v1630
    %v1632 = vrot.slane %v1631, 1
    %v1633 = vadd.f32 %v1631, %v1632
    %v1634 = vmul.f32 %v1633, %v322
    %v1635 = vadd.f32 %v1634, 1e-05
    %v1636 = vrsqrt.pop %v1635
    %v1637 = vmul.f32 %v1636, %v1635
    %v1638 = vmul.f32 %v1637, %v1636
    %v1639 = vmul.f32 0.5, %v1638
    %v1640 = vsub.f32 1.5, %v1639
    %v1641 = vmul.f32 %v1636, %v1640
    %vm1642 = vweird.f32 %v1635
    %vm1643 = vweird.f32 %v1636
    %vm1644 = vmor %vm1642, %vm1643
    %v1645 = vsel %vm1644, %v1636, %v1641
    %v1646 = vmul.f32 %v1372, %v1645
    %v1647 = vmul.f32 %v1532, %v1646
    %v1648 = vsub.f32 %v1373, %v1647
    %v1650 = vperm.slane %v1646, 0
    %v1652 = vmul.f32 %v1416, %v1650
    %v1653 = vmul.f32 %v1418, %v1650
    %v1654 = vmul.f32 %v1421, %v1650
    %v1655 = vmul.f32 %v1423, %v1650
    %v1656 = vmul.f32 %v1426, %v1650
    %v1657 = vmul.f32 %v1428, %v1650
    %v1658 = vmul.f32 %v1431, %v1650
    %v1659 = vmul.f32 %v1433, %v1650
    %v1660 = vmul.f32 %v1436, %v1650
    %v1661 = vmul.f32 %v1438, %v1650
    %v1662 = vmul.f32 %v1441, %v1650
    %v1663 = vmul.f32 %v1443, %v1650
    %v1664 = vmul.f32 %v1446, %v1650
    %v1665 = vmul.f32 %v1448, %v1650
    %v1666 = vmul.f32 %v1451, %v1650
    %v1667 = vmul.f32 %v1453, %v1650
    %v1668 = vmul.f32 %v1456, %v1650
    %v1669 = vmul.f32 %v1458, %v1650
    %v1670 = vmul.f32 %v1461, %v1650
    %v1671 = vmul.f32 %v1463, %v1650
    %v1672 = vmul.f32 %v1466, %v1650
    %v1673 = vmul.f32 %v1468, %v1650
    %v1674 = vmul.f32 %v1471, %v1650
    %v1675 = vmul.f32 %v1473, %v1650
    %v1676 = vmul.f32 %v1476, %v1650
    %v1677 = vmul.f32 %v1478, %v1650
    %v1678 = vmul.f32 %v1481, %v1650
    %v1679 = vmul.f32 %v1483, %v1650
    %v1680 = vmul.f32 %v1486, %v1650
    %v1681 = vmul.f32 %v1488, %v1650
    %v1682 = vmul.f32 %v1491, %v1650
    %v1683 = vmul.f32 %v1493, %v1650
    %v1685 = vperm.slane %v1648, 0
    %v1687 = vadd.f32 %v1652, %v1685
    %v1688 = vadd.f32 %v1653, %v1685
    %v1689 = vadd.f32 %v1654, %v1685
    %v1690 = vadd.f32 %v1655, %v1685
    %v1691 = vadd.f32 %v1656, %v1685
    %v1692 = vadd.f32 %v1657, %v1685
    %v1693 = vadd.f32 %v1658, %v1685
    %v1694 = vadd.f32 %v1659, %v1685
    %v1695 = vadd.f32 %v1660, %v1685
    %v1696 = vadd.f32 %v1661, %v1685
    %v1697 = vadd.f32 %v1662, %v1685
    %v1698 = vadd.f32 %v1663, %v1685
    %v1699 = vadd.f32 %v1664, %v1685
    %v1700 = vadd.f32 %v1665, %v1685
    %v1701 = vadd.f32 %v1666, %v1685
    %v1702 = vadd.f32 %v1667, %v1685
    %v1703 = vadd.f32 %v1668, %v1685
    %v1704 = vadd.f32 %v1669, %v1685
    %v1705 = vadd.f32 %v1670, %v1685
    %v1706 = vadd.f32 %v1671, %v1685
    %v1707 = vadd.f32 %v1672, %v1685
    %v1708 = vadd.f32 %v1673, %v1685
    %v1709 = vadd.f32 %v1674, %v1685
    %v1710 = vadd.f32 %v1675, %v1685
    %v1711 = vadd.f32 %v1676, %v1685
    %v1712 = vadd.f32 %v1677, %v1685
    %v1713 = vadd.f32 %v1678, %v1685
    %v1714 = vadd.f32 %v1679, %v1685
    %v1715 = vadd.f32 %v1680, %v1685
    %v1716 = vadd.f32 %v1681, %v1685
    %v1717 = vadd.f32 %v1682, %v1685
    %v1718 = vadd.f32 %v1683, %v1685
    %v1719 = vadd.f32 %v1340, %v1687
    %v1720 = vadd.f32 %v1341, %v1688
    %v1721 = vadd.f32 %v1342, %v1689
    %v1722 = vadd.f32 %v1343, %v1690
    %v1723 = vadd.f32 %v1344, %v1691
    %v1724 = vadd.f32 %v1345, %v1692
    %v1725 = vadd.f32 %v1346, %v1693
    %v1726 = vadd.f32 %v1347, %v1694
    %v1727 = vadd.f32 %v1348, %v1695
    %v1728 = vadd.f32 %v1349, %v1696
    %v1729 = vadd.f32 %v1350, %v1697
    %v1730 = vadd.f32 %v1351, %v1698
    %v1731 = vadd.f32 %v1352, %v1699
    %v1732 = vadd.f32 %v1353, %v1700
    %v1733 = vadd.f32 %v1354, %v1701
    %v1734 = vadd.f32 %v1355, %v1702
    %v1735 = vadd.f32 %v1356, %v1703
    %v1736 = vadd.f32 %v1357, %v1704
    %v1737 = vadd.f32 %v1358, %v1705
    %v1738 = vadd.f32 %v1359, %v1706
    %v1739 = vadd.f32 %v1360, %v1707
    %v1740 = vadd.f32 %v1361, %v1708
    %v1741 = vadd.f32 %v1362, %v1709
    %v1742 = vadd.f32 %v1363, %v1710
    %v1743 = vadd.f32 %v1364, %v1711
    %v1744 = vadd.f32 %v1365, %v1712
    %v1745 = vadd.f32 %v1366, %v1713
    %v1746 = vadd.f32 %v1367, %v1714
    %v1747 = vadd.f32 %v1368, %v1715
    %v1748 = vadd.f32 %v1369, %v1716
    %v1749 = vadd.f32 %v1370, %v1717
    %v1750 = vadd.f32 %v1371, %v1718
    %v1751 = vmax.f32 %v1719, 0.0
    %v1752 = vmax.f32 %v1720, 0.0
    %v1753 = vmax.f32 %v1721, 0.0
    %v1754 = vmax.f32 %v1722, 0.0
    %v1755 = vmax.f32 %v1723, 0.0
    %v1756 = vmax.f32 %v1724, 0.0
    %v1757 = vmax.f32 %v1725, 0.0
    %v1758 = vmax.f32 %v1726, 0.0
    %v1759 = vmax.f32 %v1727, 0.0
    %v1760 = vmax.f32 %v1728, 0.0
    %v1761 = vmax.f32 %v1729, 0.0
    %v1762 = vmax.f32 %v1730, 0.0
    %v1763 = vmax.f32 %v1731, 0.0
    %v1764 = vmax.f32 %v1732, 0.0
    %v1765 = vmax.f32 %v1733, 0.0
    %v1766 = vmax.f32 %v1734, 0.0
    %v1767 = vmax.f32 %v1735, 0.0
    %v1768 = vmax.f32 %v1736, 0.0
    %v1769 = vmax.f32 %v1737, 0.0
    %v1770 = vmax.f32 %v1738, 0.0
    %v1771 = vmax.f32 %v1739, 0.0
    %v1772 = vmax.f32 %v1740, 0.0
    %v1773 = vmax.f32 %v1741, 0.0
    %v1774 = vmax.f32 %v1742, 0.0
    %v1775 = vmax.f32 %v1743, 0.0
    %v1776 = vmax.f32 %v1744, 0.0
    %v1777 = vmax.f32 %v1745, 0.0
    %v1778 = vmax.f32 %v1746, 0.0
    %v1779 = vmax.f32 %v1747, 0.0
    %v1780 = vmax.f32 %v1748, 0.0
    %v1781 = vmax.f32 %v1749, 0.0
    %v1782 = vmax.f32 %v1750, 0.0
    %1783 = vst [vmem:[#allocation2] sm:$0xff] %v1751
    %1784 = vst [vmem:[#allocation2 + $0x8] sm:$0xff] %v1752
    %1785 = vst [vmem:[#allocation2 + $0x10] sm:$0xff] %v1753
    %1786 = vst [vmem:[#allocation2 + $0x18] sm:$0xff] %v1754
    %1787 = vst [vmem:[#allocation2 + $0x20] sm:$0xff] %v1755
    %1788 = vst [vmem:[#allocation2 + $0x28] sm:$0xff] %v1756
    %1789 = vst [vmem:[#allocation2 + $0x30] sm:$0xff] %v1757
    %1790 = vst [vmem:[#allocation2 + $0x38] sm:$0xff] %v1758
    %1791 = vst [vmem:[#allocation2 + $0x40] sm:$0xff] %v1759
    %1792 = vst [vmem:[#allocation2 + $0x48] sm:$0xff] %v1760
    %1793 = vst [vmem:[#allocation2 + $0x50] sm:$0xff] %v1761
    %1794 = vst [vmem:[#allocation2 + $0x58] sm:$0xff] %v1762
    %1795 = vst [vmem:[#allocation2 + $0x60] sm:$0xff] %v1763
    %1796 = vst [vmem:[#allocation2 + $0x68] sm:$0xff] %v1764
    %1797 = vst [vmem:[#allocation2 + $0x70] sm:$0xff] %v1765
    %1798 = vst [vmem:[#allocation2 + $0x78] sm:$0xff] %v1766
    %1799 = vst [vmem:[#allocation2 + $0x80] sm:$0xff] %v1767
    %1800 = vst [vmem:[#allocation2 + $0x88] sm:$0xff] %v1768
    %1801 = vst [vmem:[#allocation2 + $0x90] sm:$0xff] %v1769
    %1802 = vst [vmem:[#allocation2 + $0x98] sm:$0xff] %v1770
    %1803 = vst [vmem:[#allocation2 + $0xa0] sm:$0xff] %v1771
    %1804 = vst [vmem:[#allocation2 + $0xa8] sm:$0xff] %v1772
    %1805 = vst [vmem:[#allocation2 + $0xb0] sm:$0xff] %v1773
    %1806 = vst [vmem:[#allocation2 + $0xb8] sm:$0xff] %v1774
    %1807 = vst [vmem:[#allocation2 + $0xc0] sm:$0xff] %v1775
    %1808 = vst [vmem:[#allocation2 + $0xc8] sm:$0xff] %v1776
    %1809 = vst [vmem:[#allocation2 + $0xd0] sm:$0xff] %v1777
    %1810 = vst [vmem:[#allocation2 + $0xd8] sm:$0xff] %v1778
    %1811 = vst [vmem:[#allocation2 + $0xe0] sm:$0xff] %v1779
    %1812 = vst [vmem:[#allocation2 + $0xe8] sm:$0xff] %v1780
    %1813 = vst [vmem:[#allocation2 + $0xf0] sm:$0xff] %v1781
    %1814 = vst [vmem:[#allocation2 + $0xf8] sm:$0xff] %v1782
    // Predicated region
    $region66: #{tpu_custom_call.1} parent=1 // pred_check
      _
    $region67: #{tpu_custom_call.1} parent=1 // pred_check_branch
      %1816 = sbr.rel (0) target = $region69
    $region68: #{tpu_custom_call.1} parent=1 // pred_region
      %1818 = vsyncadd [#allocation3], 0
      %s1819 = sshll.u32 [#allocation2], 4
      %s1820 = int_to_ptr.vmem [resolvable:$true] %s1819
      %s1821 = sshll.u32 %s16, 4
      %s1822 = int_to_ptr.hbm [resolvable:$true] %s1821
      %1827 = dma.vmem_to_hbm [thread:$0]  %s1820, 4096, %s1822, [#allocation3], 128, 128, 8
    $region69: #{tpu_custom_call.1} parent=1 // pred_fallthru
      _
    // Predicated region
    $region70: #{tpu_custom_call.1} parent=1 // pred_check
      _
    $region71: #{tpu_custom_call.1} parent=1 // pred_check_branch
      %1829 = sbr.rel (0) target = $region73
    $region72: #{tpu_custom_call.1} parent=1 // pred_region
      %1831 = dma.done [#allocation3], 4096
    $region73: #{tpu_custom_call.1} parent=1 // pred_fallthru
      _
    %1832 = vsyncpa [#allocation3], 1

</llo_original>
